<compile_context>
chip_gen: v7x
topology: tpu7x:2x2x1
jax: 0.10.0
libtpu: 0.0.40
codegen_flags: <defaults>
</compile_context>

<pallas_src>
import functools
import math

import jax
import jax.numpy as jnp
from jax.experimental import pallas as pl
from jax.experimental.pallas import tpu as pltpu


# ---------------------------------------------------------------------------
# Fused encoder kernel: one grid step == one encoder layer (+ final LN on the
# last step). The activation is carried across grid steps in the resident
# output block (constant out index_map on the layer axis).
# ---------------------------------------------------------------------------

def _encoder_kernel(
    x_ref,                                    # [M, D]  f32 input (read at layer 0)
    ln1w_ref, ln1b_ref,                       # [1, 1, D] f32 each (per-layer)
    wqkv_ref, bqkv_ref,                       # [1, D, 3D] bf16, [1, 1, 3D] f32
    wo_ref, bo_ref,                           # [1, D, D] bf16, [1, 1, D] f32
    ln2w_ref, ln2b_ref,                       # [1, 1, D] f32 each
    w1_ref, b1_ref,                           # [1, D, F] bf16, [1, 1, F] f32
    w2_ref, b2_ref,                           # [1, F, D] bf16, [1, 1, D] f32
    nw_ref, nb_ref,                           # [1, D] f32 final Encoder.norm
    o_ref,                                    # [M, D] f32 carried activation + output
    *, B, S, H, dk, ln_eps, final_eps):

    layer = pl.program_id(0)
    n_layers = pl.num_programs(0)
    D = H * dk
    M = B * S
    scale = 1.0 / math.sqrt(dk)

    # Load x from HBM once; afterwards the activation lives in the resident
    # output block (carried across the "arbitrary" layer axis).
    @pl.when(layer == 0)
    def _():
        o_ref[...] = x_ref[...]

    x = o_ref[...]                            # f32 [M, D]

    def layer_norm(v, w, b, eps):
        # TF-style LayerNorm (spec): biased variance, eps inside the sqrt.
        mean = jnp.mean(v, axis=-1, keepdims=True)
        var = jnp.mean((v - mean) ** 2, axis=-1, keepdims=True)
        return w * ((v - mean) * jax.lax.rsqrt(var + eps)) + b

    # ---- sublayer 0: x + SelfAttn(LayerNorm(x))  (mask=None, eval) ----------
    xn = layer_norm(x, ln1w_ref[0], ln1b_ref[0], ln_eps)
    # Fused QKV projection: one bf16 [M, D] @ [D, 3D] matmul, f32 accumulation.
    qkv = jnp.dot(xn.astype(jnp.bfloat16), wqkv_ref[0],
                  preferred_element_type=jnp.float32) + bqkv_ref[0]
    # Leading-dim-only reshape (lane dim unchanged) to expose the batch axis.
    qkv3 = qkv.reshape(B, S, 3 * D)

    # Attention: batch handled by batched einsums; small static loop over heads.
    head_outs = []
    for h in range(H):
        c0 = h * dk
        # 1/sqrt(dk) folded into q (the [B,S,dk] operand, not the [S,S] scores).
        q = (qkv3[:, :, c0:c0 + dk] * scale).astype(jnp.bfloat16)
        k = qkv3[:, :, D + c0:D + c0 + dk].astype(jnp.bfloat16)
        v = qkv3[:, :, 2 * D + c0:2 * D + c0 + dk].astype(jnp.bfloat16)
        # Contract on dk via einsum — no materialized k.T.
        s = jnp.einsum('bqd,bkd->bqk', q, k, preferred_element_type=jnp.float32)
        m = jnp.max(s, axis=-1, keepdims=True)
        p = jnp.exp(s - m)
        p = p * pl.reciprocal(jnp.sum(p, axis=-1, keepdims=True), approx=True)
        head_outs.append(
            jnp.einsum('bqk,bkd->bqd', p.astype(jnp.bfloat16), v,
                       preferred_element_type=jnp.float32))
    # Assemble heads in registers (no scratch store/reload, no masked stores).
    attn = jnp.concatenate(head_outs, axis=-1).reshape(M, D)

    attn = jnp.dot(attn.astype(jnp.bfloat16), wo_ref[0],
                   preferred_element_type=jnp.float32) + bo_ref[0]
    x = x + attn

    # ---- sublayer 1: x + FFN(LayerNorm(x)) -----------------------------------
    xn = layer_norm(x, ln2w_ref[0], ln2b_ref[0], ln_eps)
    h1 = jnp.maximum(
        jnp.dot(xn.astype(jnp.bfloat16), w1_ref[0],
                preferred_element_type=jnp.float32) + b1_ref[0], 0.0)
    ff = jnp.dot(h1.astype(jnp.bfloat16), w2_ref[0],
                 preferred_element_type=jnp.float32) + b2_ref[0]
    x = x + ff

    # Carry the activation, or on the last layer write the final Encoder
    # LayerNorm (eps=1e-12) to the output.
    @pl.when(layer < n_layers - 1)
    def _():
        o_ref[...] = x

    @pl.when(layer == n_layers - 1)
    def _():
        o_ref[...] = layer_norm(x, nw_ref[...], nb_ref[...], final_eps)


# ---------------------------------------------------------------------------
# Wrapper
# ---------------------------------------------------------------------------

def encoder_forward(x, params, n_heads):
    B, S, D = x.shape
    L = params["wqkv"].shape[0]
    F = params["w1"].shape[-1]
    dk = D // n_heads
    M = B * S
    x2d = x.reshape(M, D)

    kernel = functools.partial(
        _encoder_kernel, B=B, S=S, H=n_heads, dk=dk, ln_eps=1e-5, final_eps=1e-12)

    wmap = lambda l: (l, 0, 0)       # per-layer stacked weights
    fmap = lambda l: (0, 0)          # layer-invariant blocks (x, output, final norm)

    # Advisory cost estimate (helps XLA schedule around the custom call).
    flops = L * (2 * M * D * 3 * D                   # fused QKV projection
                 + 4 * B * n_heads * S * S * dk      # scores + weighted sum
                 + 2 * M * D * D                     # output projection
                 + 2 * M * D * F + 2 * M * F * D)    # FFN
    trans = L * (B * n_heads * S * S + 3 * M) + M    # exp + rsqrt/recip
    param_bytes = sum(int(v.size) * v.dtype.itemsize for v in params.values())
    bytes_acc = 4 * 2 * M * D + param_bytes

    out2d = pl.pallas_call(
        kernel,
        out_shape=jax.ShapeDtypeStruct((M, D), x.dtype),
        grid_spec=pltpu.PrefetchScalarGridSpec(
            num_scalar_prefetch=0,
            grid=(L,),
            in_specs=[
                pl.BlockSpec((M, D), fmap),            # x (read at layer 0)
                pl.BlockSpec((1, 1, D), wmap),         # ln1_w
                pl.BlockSpec((1, 1, D), wmap),         # ln1_b
                pl.BlockSpec((1, D, 3 * D), wmap),     # wqkv (fused, bf16)
                pl.BlockSpec((1, 1, 3 * D), wmap),     # bqkv
                pl.BlockSpec((1, D, D), wmap),         # wo (bf16)
                pl.BlockSpec((1, 1, D), wmap),         # bo
                pl.BlockSpec((1, 1, D), wmap),         # ln2_w
                pl.BlockSpec((1, 1, D), wmap),         # ln2_b
                pl.BlockSpec((1, D, F), wmap),         # w1 (bf16)
                pl.BlockSpec((1, 1, F), wmap),         # b1
                pl.BlockSpec((1, F, D), wmap),         # w2 (bf16)
                pl.BlockSpec((1, 1, D), wmap),         # b2
                pl.BlockSpec((1, D), fmap),            # final norm weight
                pl.BlockSpec((1, D), fmap),            # final norm bias
            ],
            out_specs=pl.BlockSpec((M, D), fmap),      # resident: carries x
        ),
        compiler_params=pltpu.CompilerParams(
            dimension_semantics=("arbitrary",),        # layers are sequential
            vmem_limit_bytes=64 * 1024 * 1024,         # explicit scoped-VMEM cap
        ),
        cost_estimate=pl.CostEstimate(
            flops=int(flops),
            transcendentals=int(trans),
            bytes_accessed=int(bytes_acc)),
    )(
        x2d,
        params["ln1_w"], params["ln1_b"],
        params["wqkv"], params["bqkv"],
        params["wo"], params["bo"],
        params["ln2_w"], params["ln2_b"],
        params["w1"], params["b1"],
        params["w2"], params["b2"],
        params["norm_w"], params["norm_b"],
    )
    return out2d.reshape(B, S, D)


# ---------------------------------------------------------------------------
# Parameter construction (deterministic, synthetic, pre-stacked per layer).
# Matmul weights stored in bf16 (MXU operands); LN params / biases in f32.
# ---------------------------------------------------------------------------

def init_params(key, n_layers, d_model, n_heads, d_ff):
    L, D, F = n_layers, d_model, d_ff
    ks = jax.random.split(key, 8)
    s = 0.05
    bf16 = lambda a: a.astype(jnp.bfloat16)
    return {
        # sublayer-0 (self-attention) pre-norm + fused QKV + output proj
        "ln1_w": jnp.ones((L, 1, D), jnp.float32),
        "ln1_b": jnp.zeros((L, 1, D), jnp.float32),
        "wqkv": bf16(s * jax.random.normal(ks[0], (L, D, 3 * D), jnp.float32)),
        "bqkv": s * jax.random.normal(ks[1], (L, 1, 3 * D), jnp.float32),
        "wo": bf16(s * jax.random.normal(ks[2], (L, D, D), jnp.float32)),
        "bo": s * jax.random.normal(ks[3], (L, 1, D), jnp.float32),
        # sublayer-1 (feed-forward) pre-norm + FFN
        "ln2_w": jnp.ones((L, 1, D), jnp.float32),
        "ln2_b": jnp.zeros((L, 1, D), jnp.float32),
        "w1": bf16(s * jax.random.normal(ks[4], (L, D, F), jnp.float32)),
        "b1": s * jax.random.normal(ks[5], (L, 1, F), jnp.float32),
        "w2": bf16(s * jax.random.normal(ks[6], (L, F, D), jnp.float32)),
        "b2": s * jax.random.normal(ks[7], (L, 1, D), jnp.float32),
        # Encoder.norm = LayerNorm(layer.size, eps=1e-12)
        "norm_w": jnp.ones((1, D), jnp.float32),
        "norm_b": jnp.zeros((1, D), jnp.float32),
    }


# ---------------------------------------------------------------------------

if __name__ == "__main__":
    B, S, D = 2, 8, 32        # batch, sequence, hidden (layer.size)
    N_LAYERS, H, D_FF = 4, 4, 64

    key = jax.random.PRNGKey(0)
    k_x, k_p = jax.random.split(key)

    x = jax.random.normal(k_x, (B, S, D), jnp.float32)
    params = init_params(k_p, N_LAYERS, D, H, D_FF)

    out = encoder_forward(x, params, n_heads=H)
    out = jax.block_until_ready(out)

    assert out.shape == (B, S, D)
    assert bool(jnp.all(jnp.isfinite(out)))
    print("KERNEL_OK")
</pallas_src>

<mosaic_0001>
module attributes {stable_mosaic.version = 11 : i64} {
  func.func @_encoder_kernel(%arg0: i32, %arg1: memref<16x32xf32, #tpu.memory_space<vmem>>, %arg2: memref<1x1x32xf32, #tpu.memory_space<vmem>>, %arg3: memref<1x1x32xf32, #tpu.memory_space<vmem>>, %arg4: memref<1x32x96xbf16, #tpu.memory_space<vmem>>, %arg5: memref<1x1x96xf32, #tpu.memory_space<vmem>>, %arg6: memref<1x32x32xbf16, #tpu.memory_space<vmem>>, %arg7: memref<1x1x32xf32, #tpu.memory_space<vmem>>, %arg8: memref<1x1x32xf32, #tpu.memory_space<vmem>>, %arg9: memref<1x1x32xf32, #tpu.memory_space<vmem>>, %arg10: memref<1x32x64xbf16, #tpu.memory_space<vmem>>, %arg11: memref<1x1x64xf32, #tpu.memory_space<vmem>>, %arg12: memref<1x64x32xbf16, #tpu.memory_space<vmem>>, %arg13: memref<1x1x32xf32, #tpu.memory_space<vmem>>, %arg14: memref<1x32xf32, #tpu.memory_space<vmem>>, %arg15: memref<1x32xf32, #tpu.memory_space<vmem>>, %arg16: memref<16x32xf32, #tpu.memory_space<vmem>>) attributes {dimension_semantics = [#tpu.dimension_semantics<arbitrary>], iteration_bounds = array<i64: 4>, scalar_prefetch = 0 : i64, scratch_operands = 0 : i64, tpu.core_type = #tpu.core_type<tc>, window_params = [{pipeline_mode = #tpu.pipeline_mode<synchronous>, transform_indices = @transform_0, window_bounds = array<i64: 16, 32>}, {transform_indices = @transform_1, window_bounds = array<i64: 1, 1, 32>}, {transform_indices = @transform_2, window_bounds = array<i64: 1, 1, 32>}, {transform_indices = @transform_3, window_bounds = array<i64: 1, 32, 96>}, {transform_indices = @transform_4, window_bounds = array<i64: 1, 1, 96>}, {transform_indices = @transform_5, window_bounds = array<i64: 1, 32, 32>}, {transform_indices = @transform_6, window_bounds = array<i64: 1, 1, 32>}, {transform_indices = @transform_7, window_bounds = array<i64: 1, 1, 32>}, {transform_indices = @transform_8, window_bounds = array<i64: 1, 1, 32>}, {transform_indices = @transform_9, window_bounds = array<i64: 1, 32, 64>}, {transform_indices = @transform_10, window_bounds = array<i64: 1, 1, 64>}, {transform_indices = @transform_11, window_bounds = array<i64: 1, 64, 32>}, {transform_indices = @transform_12, window_bounds = array<i64: 1, 1, 32>}, {pipeline_mode = #tpu.pipeline_mode<synchronous>, transform_indices = @transform_13, window_bounds = array<i64: 1, 32>}, {pipeline_mode = #tpu.pipeline_mode<synchronous>, transform_indices = @transform_14, window_bounds = array<i64: 1, 32>}, {pipeline_mode = #tpu.pipeline_mode<synchronous>, transform_indices = @transform_15, window_bounds = array<i64: 16, 32>}]} {
    %c0_i32 = arith.constant 0 : i32
    %0 = arith.cmpi eq, %arg0, %c0_i32 : i32
    %1 = arith.extui %0 : i1 to i32
    %c0_i32_0 = arith.constant 0 : i32
    %2 = arith.cmpi ne, %1, %c0_i32_0 : i32
    scf.if %2 {
      %c0_75 = arith.constant 0 : index
      %c0_76 = arith.constant 0 : index
      %185 = vector.load %arg1[%c0_75, %c0_76] : memref<16x32xf32, #tpu.memory_space<vmem>>, vector<16x32xf32>
      %c0_77 = arith.constant 0 : index
      %c0_78 = arith.constant 0 : index
      %186 = vector.load %arg16[%c0_77, %c0_78] : memref<16x32xf32, #tpu.memory_space<vmem>>, vector<16x32xf32>
      tpu.vector_store %arg16[%c0_77, %c0_78], %185 {strides = array<i32>} : memref<16x32xf32, #tpu.memory_space<vmem>>, vector<16x32xf32>,
    } else {
    }
    %c0 = arith.constant 0 : index
    %c0_1 = arith.constant 0 : index
    %3 = vector.load %arg16[%c0, %c0_1] : memref<16x32xf32, #tpu.memory_space<vmem>>, vector<16x32xf32>
    %c0_2 = arith.constant 0 : index
    %c0_3 = arith.constant 0 : index
    %c0_4 = arith.constant 0 : index
    %4 = vector.load %arg2[%c0_2, %c0_3, %c0_4] : memref<1x1x32xf32, #tpu.memory_space<vmem>>, vector<1x1x32xf32>
    %5 = vector.shape_cast %4 : vector<1x1x32xf32> to vector<1x32xf32>
    %c0_5 = arith.constant 0 : index
    %c0_6 = arith.constant 0 : index
    %c0_7 = arith.constant 0 : index
    %6 = vector.load %arg3[%c0_5, %c0_6, %c0_7] : memref<1x1x32xf32, #tpu.memory_space<vmem>>, vector<1x1x32xf32>
    %7 = vector.shape_cast %6 : vector<1x1x32xf32> to vector<1x32xf32>
    %cst = arith.constant dense<0.000000e+00> : vector<16xf32>
    %8 = vector.multi_reduction <add>, %3, %cst [1] : vector<16x32xf32> to vector<16xf32>
    %9 = vector.shape_cast %8 : vector<16xf32> to vector<16x1xf32>
    %cst_8 = arith.constant 3.200000e+01 : f32
    %10 = vector.broadcast %cst_8 : f32 to vector<16x1xf32>
    %11 = arith.divf %9, %10 : vector<16x1xf32>
    %12 = vector.broadcast %11 : vector<16x1xf32> to vector<16x32xf32>
    %13 = arith.subf %3, %12 : vector<16x32xf32>
    %14 = arith.mulf %13, %13 : vector<16x32xf32>
    %cst_9 = arith.constant dense<0.000000e+00> : vector<16xf32>
    %15 = vector.multi_reduction <add>, %14, %cst_9 [1] : vector<16x32xf32> to vector<16xf32>
    %16 = vector.shape_cast %15 : vector<16xf32> to vector<16x1xf32>
    %cst_10 = arith.constant 3.200000e+01 : f32
    %17 = vector.broadcast %cst_10 : f32 to vector<16x1xf32>
    %18 = arith.divf %16, %17 : vector<16x1xf32>
    %19 = vector.broadcast %11 : vector<16x1xf32> to vector<16x32xf32>
    %20 = arith.subf %3, %19 : vector<16x32xf32>
    %cst_11 = arith.constant 9.99999974E-6 : f32
    %21 = vector.broadcast %cst_11 : f32 to vector<16x1xf32>
    %22 = arith.addf %18, %21 : vector<16x1xf32>
    %23 = math.rsqrt %22 : vector<16x1xf32>
    %24 = vector.broadcast %23 : vector<16x1xf32> to vector<16x32xf32>
    %25 = arith.mulf %20, %24 : vector<16x32xf32>
    %26 = vector.broadcast %5 : vector<1x32xf32> to vector<16x32xf32>
    %27 = arith.mulf %26, %25 : vector<16x32xf32>
    %28 = vector.broadcast %7 : vector<1x32xf32> to vector<16x32xf32>
    %29 = arith.addf %27, %28 : vector<16x32xf32>
    %30 = arith.truncf %29 : vector<16x32xf32> to vector<16x32xbf16>
    %c0_12 = arith.constant 0 : index
    %c0_13 = arith.constant 0 : index
    %c0_14 = arith.constant 0 : index
    %31 = vector.load %arg4[%c0_12, %c0_13, %c0_14] : memref<1x32x96xbf16, #tpu.memory_space<vmem>>, vector<1x32x96xbf16>
    %32 = vector.shape_cast %31 : vector<1x32x96xbf16> to vector<32x96xbf16>
    %cst_15 = arith.constant dense<0.000000e+00> : vector<16x96xf32>
    %33 = tpu.matmul %30, %32, %cst_15 {dimension_numbers = #tpu.dot_dimension_numbers<[1], [0], [0], [1], [0, 0, 1, 1], [], []>} : vector<16x32xbf16>, vector<32x96xbf16>, vector<16x96xf32> -> vector<16x96xf32>
    %c0_16 = arith.constant 0 : index
    %c0_17 = arith.constant 0 : index
    %c0_18 = arith.constant 0 : index
    %34 = vector.load %arg5[%c0_16, %c0_17, %c0_18] : memref<1x1x96xf32, #tpu.memory_space<vmem>>, vector<1x1x96xf32>
    %35 = vector.shape_cast %34 : vector<1x1x96xf32> to vector<1x96xf32>
    %36 = vector.broadcast %35 : vector<1x96xf32> to vector<16x96xf32>
    %37 = arith.addf %33, %36 : vector<16x96xf32>
    %38 = vector.shape_cast %37 : vector<16x96xf32> to vector<2x8x96xf32>
    %39 = vector.extract_strided_slice %38 {offsets = [0, 0, 0], sizes = [2, 8, 8], strides = [1, 1, 1]} : vector<2x8x96xf32> to vector<2x8x8xf32>
    %cst_19 = arith.constant 0.353553385 : f32
    %40 = vector.broadcast %cst_19 : f32 to vector<2x8x8xf32>
    %41 = arith.mulf %39, %40 : vector<2x8x8xf32>
    %42 = arith.truncf %41 : vector<2x8x8xf32> to vector<2x8x8xbf16>
    %43 = vector.extract_strided_slice %38 {offsets = [0, 0, 32], sizes = [2, 8, 8], strides = [1, 1, 1]} : vector<2x8x96xf32> to vector<2x8x8xf32>
    %44 = arith.truncf %43 : vector<2x8x8xf32> to vector<2x8x8xbf16>
    %45 = vector.extract_strided_slice %38 {offsets = [0, 0, 64], sizes = [2, 8, 8], strides = [1, 1, 1]} : vector<2x8x96xf32> to vector<2x8x8xf32>
    %46 = arith.truncf %45 : vector<2x8x8xf32> to vector<2x8x8xbf16>
    "tpu.trace_start"() <{level = 10 : i32, message = "bqd,bkd->bqk"}> : () -> ()
    %cst_20 = arith.constant dense<0.000000e+00> : vector<2x8x8xf32>
    %47 = tpu.matmul %42, %44, %cst_20 {dimension_numbers = #tpu.dot_dimension_numbers<[2], [2], [1], [1], [0, 0, 0, 1, 1, 1], [0], [0]>} : vector<2x8x8xbf16>, vector<2x8x8xbf16>, vector<2x8x8xf32> -> vector<2x8x8xf32>
    "tpu.trace_stop"() : () -> ()
    %cst_21 = arith.constant dense<0xFF800000> : vector<2x8xf32>
    %48 = vector.multi_reduction <maximumf>, %47, %cst_21 [2] : vector<2x8x8xf32> to vector<2x8xf32>
    %49 = vector.shape_cast %48 : vector<2x8xf32> to vector<2x8x1xf32>
    %50 = vector.broadcast %49 : vector<2x8x1xf32> to vector<2x8x8xf32>
    %51 = arith.subf %47, %50 : vector<2x8x8xf32>
    %52 = math.exp %51 : vector<2x8x8xf32>
    %cst_22 = arith.constant dense<0.000000e+00> : vector<2x8xf32>
    %53 = vector.multi_reduction <add>, %52, %cst_22 [2] : vector<2x8x8xf32> to vector<2x8xf32>
    %54 = vector.shape_cast %53 : vector<2x8xf32> to vector<2x8x1xf32>
    %55 = tpu.reciprocal %54 {approx = true} : vector<2x8x1xf32> -> vector<2x8x1xf32>
    %56 = vector.broadcast %55 : vector<2x8x1xf32> to vector<2x8x8xf32>
    %57 = arith.mulf %52, %56 : vector<2x8x8xf32>
    %58 = arith.truncf %57 : vector<2x8x8xf32> to vector<2x8x8xbf16>
    "tpu.trace_start"() <{level = 10 : i32, message = "bqk,bkd->bqd"}> : () -> ()
    %cst_23 = arith.constant dense<0.000000e+00> : vector<2x8x8xf32>
    %59 = tpu.matmul %58, %46, %cst_23 {dimension_numbers = #tpu.dot_dimension_numbers<[2], [1], [1], [2], [0, 0, 0, 1, 1, 2], [0], [0]>} : vector<2x8x8xbf16>, vector<2x8x8xbf16>, vector<2x8x8xf32> -> vector<2x8x8xf32>
    "tpu.trace_stop"() : () -> ()
    %60 = vector.extract_strided_slice %38 {offsets = [0, 0, 8], sizes = [2, 8, 8], strides = [1, 1, 1]} : vector<2x8x96xf32> to vector<2x8x8xf32>
    %cst_24 = arith.constant 0.353553385 : f32
    %61 = vector.broadcast %cst_24 : f32 to vector<2x8x8xf32>
    %62 = arith.mulf %60, %61 : vector<2x8x8xf32>
    %63 = arith.truncf %62 : vector<2x8x8xf32> to vector<2x8x8xbf16>
    %64 = vector.extract_strided_slice %38 {offsets = [0, 0, 40], sizes = [2, 8, 8], strides = [1, 1, 1]} : vector<2x8x96xf32> to vector<2x8x8xf32>
    %65 = arith.truncf %64 : vector<2x8x8xf32> to vector<2x8x8xbf16>
    %66 = vector.extract_strided_slice %38 {offsets = [0, 0, 72], sizes = [2, 8, 8], strides = [1, 1, 1]} : vector<2x8x96xf32> to vector<2x8x8xf32>
    %67 = arith.truncf %66 : vector<2x8x8xf32> to vector<2x8x8xbf16>
    "tpu.trace_start"() <{level = 10 : i32, message = "bqd,bkd->bqk"}> : () -> ()
    %cst_25 = arith.constant dense<0.000000e+00> : vector<2x8x8xf32>
    %68 = tpu.matmul %63, %65, %cst_25 {dimension_numbers = #tpu.dot_dimension_numbers<[2], [2], [1], [1], [0, 0, 0, 1, 1, 1], [0], [0]>} : vector<2x8x8xbf16>, vector<2x8x8xbf16>, vector<2x8x8xf32> -> vector<2x8x8xf32>
    "tpu.trace_stop"() : () -> ()
    %cst_26 = arith.constant dense<0xFF800000> : vector<2x8xf32>
    %69 = vector.multi_reduction <maximumf>, %68, %cst_26 [2] : vector<2x8x8xf32> to vector<2x8xf32>
    %70 = vector.shape_cast %69 : vector<2x8xf32> to vector<2x8x1xf32>
    %71 = vector.broadcast %70 : vector<2x8x1xf32> to vector<2x8x8xf32>
    %72 = arith.subf %68, %71 : vector<2x8x8xf32>
    %73 = math.exp %72 : vector<2x8x8xf32>
    %cst_27 = arith.constant dense<0.000000e+00> : vector<2x8xf32>
    %74 = vector.multi_reduction <add>, %73, %cst_27 [2] : vector<2x8x8xf32> to vector<2x8xf32>
    %75 = vector.shape_cast %74 : vector<2x8xf32> to vector<2x8x1xf32>
    %76 = tpu.reciprocal %75 {approx = true} : vector<2x8x1xf32> -> vector<2x8x1xf32>
    %77 = vector.broadcast %76 : vector<2x8x1xf32> to vector<2x8x8xf32>
    %78 = arith.mulf %73, %77 : vector<2x8x8xf32>
    %79 = arith.truncf %78 : vector<2x8x8xf32> to vector<2x8x8xbf16>
    "tpu.trace_start"() <{level = 10 : i32, message = "bqk,bkd->bqd"}> : () -> ()
    %cst_28 = arith.constant dense<0.000000e+00> : vector<2x8x8xf32>
    %80 = tpu.matmul %79, %67, %cst_28 {dimension_numbers = #tpu.dot_dimension_numbers<[2], [1], [1], [2], [0, 0, 0, 1, 1, 2], [0], [0]>} : vector<2x8x8xbf16>, vector<2x8x8xbf16>, vector<2x8x8xf32> -> vector<2x8x8xf32>
    "tpu.trace_stop"() : () -> ()
    %81 = vector.extract_strided_slice %38 {offsets = [0, 0, 16], sizes = [2, 8, 8], strides = [1, 1, 1]} : vector<2x8x96xf32> to vector<2x8x8xf32>
    %cst_29 = arith.constant 0.353553385 : f32
    %82 = vector.broadcast %cst_29 : f32 to vector<2x8x8xf32>
    %83 = arith.mulf %81, %82 : vector<2x8x8xf32>
    %84 = arith.truncf %83 : vector<2x8x8xf32> to vector<2x8x8xbf16>
    %85 = vector.extract_strided_slice %38 {offsets = [0, 0, 48], sizes = [2, 8, 8], strides = [1, 1, 1]} : vector<2x8x96xf32> to vector<2x8x8xf32>
    %86 = arith.truncf %85 : vector<2x8x8xf32> to vector<2x8x8xbf16>
    %87 = vector.extract_strided_slice %38 {offsets = [0, 0, 80], sizes = [2, 8, 8], strides = [1, 1, 1]} : vector<2x8x96xf32> to vector<2x8x8xf32>
    %88 = arith.truncf %87 : vector<2x8x8xf32> to vector<2x8x8xbf16>
    "tpu.trace_start"() <{level = 10 : i32, message = "bqd,bkd->bqk"}> : () -> ()
    %cst_30 = arith.constant dense<0.000000e+00> : vector<2x8x8xf32>
    %89 = tpu.matmul %84, %86, %cst_30 {dimension_numbers = #tpu.dot_dimension_numbers<[2], [2], [1], [1], [0, 0, 0, 1, 1, 1], [0], [0]>} : vector<2x8x8xbf16>, vector<2x8x8xbf16>, vector<2x8x8xf32> -> vector<2x8x8xf32>
    "tpu.trace_stop"() : () -> ()
    %cst_31 = arith.constant dense<0xFF800000> : vector<2x8xf32>
    %90 = vector.multi_reduction <maximumf>, %89, %cst_31 [2] : vector<2x8x8xf32> to vector<2x8xf32>
    %91 = vector.shape_cast %90 : vector<2x8xf32> to vector<2x8x1xf32>
    %92 = vector.broadcast %91 : vector<2x8x1xf32> to vector<2x8x8xf32>
    %93 = arith.subf %89, %92 : vector<2x8x8xf32>
    %94 = math.exp %93 : vector<2x8x8xf32>
    %cst_32 = arith.constant dense<0.000000e+00> : vector<2x8xf32>
    %95 = vector.multi_reduction <add>, %94, %cst_32 [2] : vector<2x8x8xf32> to vector<2x8xf32>
    %96 = vector.shape_cast %95 : vector<2x8xf32> to vector<2x8x1xf32>
    %97 = tpu.reciprocal %96 {approx = true} : vector<2x8x1xf32> -> vector<2x8x1xf32>
    %98 = vector.broadcast %97 : vector<2x8x1xf32> to vector<2x8x8xf32>
    %99 = arith.mulf %94, %98 : vector<2x8x8xf32>
    %100 = arith.truncf %99 : vector<2x8x8xf32> to vector<2x8x8xbf16>
    "tpu.trace_start"() <{level = 10 : i32, message = "bqk,bkd->bqd"}> : () -> ()
    %cst_33 = arith.constant dense<0.000000e+00> : vector<2x8x8xf32>
    %101 = tpu.matmul %100, %88, %cst_33 {dimension_numbers = #tpu.dot_dimension_numbers<[2], [1], [1], [2], [0, 0, 0, 1, 1, 2], [0], [0]>} : vector<2x8x8xbf16>, vector<2x8x8xbf16>, vector<2x8x8xf32> -> vector<2x8x8xf32>
    "tpu.trace_stop"() : () -> ()
    %102 = vector.extract_strided_slice %38 {offsets = [0, 0, 24], sizes = [2, 8, 8], strides = [1, 1, 1]} : vector<2x8x96xf32> to vector<2x8x8xf32>
    %cst_34 = arith.constant 0.353553385 : f32
    %103 = vector.broadcast %cst_34 : f32 to vector<2x8x8xf32>
    %104 = arith.mulf %102, %103 : vector<2x8x8xf32>
    %105 = arith.truncf %104 : vector<2x8x8xf32> to vector<2x8x8xbf16>
    %106 = vector.extract_strided_slice %38 {offsets = [0, 0, 56], sizes = [2, 8, 8], strides = [1, 1, 1]} : vector<2x8x96xf32> to vector<2x8x8xf32>
    %107 = arith.truncf %106 : vector<2x8x8xf32> to vector<2x8x8xbf16>
    %108 = vector.extract_strided_slice %38 {offsets = [0, 0, 88], sizes = [2, 8, 8], strides = [1, 1, 1]} : vector<2x8x96xf32> to vector<2x8x8xf32>
    %109 = arith.truncf %108 : vector<2x8x8xf32> to vector<2x8x8xbf16>
    "tpu.trace_start"() <{level = 10 : i32, message = "bqd,bkd->bqk"}> : () -> ()
    %cst_35 = arith.constant dense<0.000000e+00> : vector<2x8x8xf32>
    %110 = tpu.matmul %105, %107, %cst_35 {dimension_numbers = #tpu.dot_dimension_numbers<[2], [2], [1], [1], [0, 0, 0, 1, 1, 1], [0], [0]>} : vector<2x8x8xbf16>, vector<2x8x8xbf16>, vector<2x8x8xf32> -> vector<2x8x8xf32>
    "tpu.trace_stop"() : () -> ()
    %cst_36 = arith.constant dense<0xFF800000> : vector<2x8xf32>
    %111 = vector.multi_reduction <maximumf>, %110, %cst_36 [2] : vector<2x8x8xf32> to vector<2x8xf32>
    %112 = vector.shape_cast %111 : vector<2x8xf32> to vector<2x8x1xf32>
    %113 = vector.broadcast %112 : vector<2x8x1xf32> to vector<2x8x8xf32>
    %114 = arith.subf %110, %113 : vector<2x8x8xf32>
    %115 = math.exp %114 : vector<2x8x8xf32>
    %cst_37 = arith.constant dense<0.000000e+00> : vector<2x8xf32>
    %116 = vector.multi_reduction <add>, %115, %cst_37 [2] : vector<2x8x8xf32> to vector<2x8xf32>
    %117 = vector.shape_cast %116 : vector<2x8xf32> to vector<2x8x1xf32>
    %118 = tpu.reciprocal %117 {approx = true} : vector<2x8x1xf32> -> vector<2x8x1xf32>
    %119 = vector.broadcast %118 : vector<2x8x1xf32> to vector<2x8x8xf32>
    %120 = arith.mulf %115, %119 : vector<2x8x8xf32>
    %121 = arith.truncf %120 : vector<2x8x8xf32> to vector<2x8x8xbf16>
    "tpu.trace_start"() <{level = 10 : i32, message = "bqk,bkd->bqd"}> : () -> ()
    %cst_38 = arith.constant dense<0.000000e+00> : vector<2x8x8xf32>
    %122 = tpu.matmul %121, %109, %cst_38 {dimension_numbers = #tpu.dot_dimension_numbers<[2], [1], [1], [2], [0, 0, 0, 1, 1, 2], [0], [0]>} : vector<2x8x8xbf16>, vector<2x8x8xbf16>, vector<2x8x8xf32> -> vector<2x8x8xf32>
    "tpu.trace_stop"() : () -> ()
    %123 = tpu.concatenate %59, %80, %101, %122 in 2 : vector<2x8x8xf32>, vector<2x8x8xf32>, vector<2x8x8xf32>, vector<2x8x8xf32> -> vector<2x8x32xf32>
    %124 = vector.shape_cast %123 : vector<2x8x32xf32> to vector<16x32xf32>
    %125 = arith.truncf %124 : vector<16x32xf32> to vector<16x32xbf16>
    %c0_39 = arith.constant 0 : index
    %c0_40 = arith.constant 0 : index
    %c0_41 = arith.constant 0 : index
    %126 = vector.load %arg6[%c0_39, %c0_40, %c0_41] : memref<1x32x32xbf16, #tpu.memory_space<vmem>>, vector<1x32x32xbf16>
    %127 = vector.shape_cast %126 : vector<1x32x32xbf16> to vector<32x32xbf16>
    %cst_42 = arith.constant dense<0.000000e+00> : vector<16x32xf32>
    %128 = tpu.matmul %125, %127, %cst_42 {dimension_numbers = #tpu.dot_dimension_numbers<[1], [0], [0], [1], [0, 0, 1, 1], [], []>} : vector<16x32xbf16>, vector<32x32xbf16>, vector<16x32xf32> -> vector<16x32xf32>
    %c0_43 = arith.constant 0 : index
    %c0_44 = arith.constant 0 : index
    %c0_45 = arith.constant 0 : index
    %129 = vector.load %arg7[%c0_43, %c0_44, %c0_45] : memref<1x1x32xf32, #tpu.memory_space<vmem>>, vector<1x1x32xf32>
    %130 = vector.shape_cast %129 : vector<1x1x32xf32> to vector<1x32xf32>
    %131 = vector.broadcast %130 : vector<1x32xf32> to vector<16x32xf32>
    %132 = arith.addf %128, %131 : vector<16x32xf32>
    %133 = arith.addf %3, %132 : vector<16x32xf32>
    %c0_46 = arith.constant 0 : index
    %c0_47 = arith.constant 0 : index
    %c0_48 = arith.constant 0 : index
    %134 = vector.load %arg8[%c0_46, %c0_47, %c0_48] : memref<1x1x32xf32, #tpu.memory_space<vmem>>, vector<1x1x32xf32>
    %135 = vector.shape_cast %134 : vector<1x1x32xf32> to vector<1x32xf32>
    %c0_49 = arith.constant 0 : index
    %c0_50 = arith.constant 0 : index
    %c0_51 = arith.constant 0 : index
    %136 = vector.load %arg9[%c0_49, %c0_50, %c0_51] : memref<1x1x32xf32, #tpu.memory_space<vmem>>, vector<1x1x32xf32>
    %137 = vector.shape_cast %136 : vector<1x1x32xf32> to vector<1x32xf32>
    %cst_52 = arith.constant dense<0.000000e+00> : vector<16xf32>
    %138 = vector.multi_reduction <add>, %133, %cst_52 [1] : vector<16x32xf32> to vector<16xf32>
    %139 = vector.shape_cast %138 : vector<16xf32> to vector<16x1xf32>
    %cst_53 = arith.constant 3.200000e+01 : f32
    %140 = vector.broadcast %cst_53 : f32 to vector<16x1xf32>
    %141 = arith.divf %139, %140 : vector<16x1xf32>
    %142 = vector.broadcast %141 : vector<16x1xf32> to vector<16x32xf32>
    %143 = arith.subf %133, %142 : vector<16x32xf32>
    %144 = arith.mulf %143, %143 : vector<16x32xf32>
    %cst_54 = arith.constant dense<0.000000e+00> : vector<16xf32>
    %145 = vector.multi_reduction <add>, %144, %cst_54 [1] : vector<16x32xf32> to vector<16xf32>
    %146 = vector.shape_cast %145 : vector<16xf32> to vector<16x1xf32>
    %cst_55 = arith.constant 3.200000e+01 : f32
    %147 = vector.broadcast %cst_55 : f32 to vector<16x1xf32>
    %148 = arith.divf %146, %147 : vector<16x1xf32>
    %149 = vector.broadcast %141 : vector<16x1xf32> to vector<16x32xf32>
    %150 = arith.subf %133, %149 : vector<16x32xf32>
    %cst_56 = arith.constant 9.99999974E-6 : f32
    %151 = vector.broadcast %cst_56 : f32 to vector<16x1xf32>
    %152 = arith.addf %148, %151 : vector<16x1xf32>
    %153 = math.rsqrt %152 : vector<16x1xf32>
    %154 = vector.broadcast %153 : vector<16x1xf32> to vector<16x32xf32>
    %155 = arith.mulf %150, %154 : vector<16x32xf32>
    %156 = vector.broadcast %135 : vector<1x32xf32> to vector<16x32xf32>
    %157 = arith.mulf %156, %155 : vector<16x32xf32>
    %158 = vector.broadcast %137 : vector<1x32xf32> to vector<16x32xf32>
    %159 = arith.addf %157, %158 : vector<16x32xf32>
    %160 = arith.truncf %159 : vector<16x32xf32> to vector<16x32xbf16>
    %c0_57 = arith.constant 0 : index
    %c0_58 = arith.constant 0 : index
    %c0_59 = arith.constant 0 : index
    %161 = vector.load %arg10[%c0_57, %c0_58, %c0_59] : memref<1x32x64xbf16, #tpu.memory_space<vmem>>, vector<1x32x64xbf16>
    %162 = vector.shape_cast %161 : vector<1x32x64xbf16> to vector<32x64xbf16>
    %cst_60 = arith.constant dense<0.000000e+00> : vector<16x64xf32>
    %163 = tpu.matmul %160, %162, %cst_60 {dimension_numbers = #tpu.dot_dimension_numbers<[1], [0], [0], [1], [0, 0, 1, 1], [], []>} : vector<16x32xbf16>, vector<32x64xbf16>, vector<16x64xf32> -> vector<16x64xf32>
    %c0_61 = arith.constant 0 : index
    %c0_62 = arith.constant 0 : index
    %c0_63 = arith.constant 0 : index
    %164 = vector.load %arg11[%c0_61, %c0_62, %c0_63] : memref<1x1x64xf32, #tpu.memory_space<vmem>>, vector<1x1x64xf32>
    %165 = vector.shape_cast %164 : vector<1x1x64xf32> to vector<1x64xf32>
    %166 = vector.broadcast %165 : vector<1x64xf32> to vector<16x64xf32>
    %167 = arith.addf %163, %166 : vector<16x64xf32>
    %cst_64 = arith.constant 0.000000e+00 : f32
    %168 = vector.broadcast %cst_64 : f32 to vector<16x64xf32>
    %169 = arith.maximumf %167, %168 : vector<16x64xf32>
    %170 = arith.truncf %169 : vector<16x64xf32> to vector<16x64xbf16>
    %c0_65 = arith.constant 0 : index
    %c0_66 = arith.constant 0 : index
    %c0_67 = arith.constant 0 : index
    %171 = vector.load %arg12[%c0_65, %c0_66, %c0_67] : memref<1x64x32xbf16, #tpu.memory_space<vmem>>, vector<1x64x32xbf16>
    %172 = vector.shape_cast %171 : vector<1x64x32xbf16> to vector<64x32xbf16>
    %cst_68 = arith.constant dense<0.000000e+00> : vector<16x32xf32>
    %173 = tpu.matmul %170, %172, %cst_68 {dimension_numbers = #tpu.dot_dimension_numbers<[1], [0], [0], [1], [0, 0, 1, 1], [], []>} : vector<16x64xbf16>, vector<64x32xbf16>, vector<16x32xf32> -> vector<16x32xf32>
    %c0_69 = arith.constant 0 : index
    %c0_70 = arith.constant 0 : index
    %c0_71 = arith.constant 0 : index
    %174 = vector.load %arg13[%c0_69, %c0_70, %c0_71] : memref<1x1x32xf32, #tpu.memory_space<vmem>>, vector<1x1x32xf32>
    %175 = vector.shape_cast %174 : vector<1x1x32xf32> to vector<1x32xf32>
    %176 = vector.broadcast %175 : vector<1x32xf32> to vector<16x32xf32>
    %177 = arith.addf %173, %176 : vector<16x32xf32>
    %178 = arith.addf %133, %177 : vector<16x32xf32>
    %c3_i32 = arith.constant 3 : i32
    %179 = arith.cmpi slt, %arg0, %c3_i32 : i32
    %180 = arith.extui %179 : i1 to i32
    %c0_i32_72 = arith.constant 0 : i32
    %181 = arith.cmpi ne, %180, %c0_i32_72 : i32
    scf.if %181 {
      %c0_75 = arith.constant 0 : index
      %c0_76 = arith.constant 0 : index
      %185 = vector.load %arg16[%c0_75, %c0_76] : memref<16x32xf32, #tpu.memory_space<vmem>>, vector<16x32xf32>
      tpu.vector_store %arg16[%c0_75, %c0_76], %178 {strides = array<i32>} : memref<16x32xf32, #tpu.memory_space<vmem>>, vector<16x32xf32>,
    } else {
    }
    %c3_i32_73 = arith.constant 3 : i32
    %182 = arith.cmpi eq, %arg0, %c3_i32_73 : i32
    %183 = arith.extui %182 : i1 to i32
    %c0_i32_74 = arith.constant 0 : i32
    %184 = arith.cmpi ne, %183, %c0_i32_74 : i32
    scf.if %184 {
      %c0_75 = arith.constant 0 : index
      %c0_76 = arith.constant 0 : index
      %185 = vector.load %arg14[%c0_75, %c0_76] : memref<1x32xf32, #tpu.memory_space<vmem>>, vector<1x32xf32>
      %c0_77 = arith.constant 0 : index
      %c0_78 = arith.constant 0 : index
      %186 = vector.load %arg15[%c0_77, %c0_78] : memref<1x32xf32, #tpu.memory_space<vmem>>, vector<1x32xf32>
      %cst_79 = arith.constant dense<0.000000e+00> : vector<16xf32>
      %187 = vector.multi_reduction <add>, %178, %cst_79 [1] : vector<16x32xf32> to vector<16xf32>
      %188 = vector.shape_cast %187 : vector<16xf32> to vector<16x1xf32>
      %cst_80 = arith.constant 3.200000e+01 : f32
      %189 = vector.broadcast %cst_80 : f32 to vector<16x1xf32>
      %190 = arith.divf %188, %189 : vector<16x1xf32>
      %191 = vector.broadcast %190 : vector<16x1xf32> to vector<16x32xf32>
      %192 = arith.subf %178, %191 : vector<16x32xf32>
      %193 = arith.mulf %192, %192 : vector<16x32xf32>
      %cst_81 = arith.constant dense<0.000000e+00> : vector<16xf32>
      %194 = vector.multi_reduction <add>, %193, %cst_81 [1] : vector<16x32xf32> to vector<16xf32>
      %195 = vector.shape_cast %194 : vector<16xf32> to vector<16x1xf32>
      %cst_82 = arith.constant 3.200000e+01 : f32
      %196 = vector.broadcast %cst_82 : f32 to vector<16x1xf32>
      %197 = arith.divf %195, %196 : vector<16x1xf32>
      %198 = vector.broadcast %190 : vector<16x1xf32> to vector<16x32xf32>
      %199 = arith.subf %178, %198 : vector<16x32xf32>
      %cst_83 = arith.constant 9.99999996E-13 : f32
      %200 = vector.broadcast %cst_83 : f32 to vector<16x1xf32>
      %201 = arith.addf %197, %200 : vector<16x1xf32>
      %202 = math.rsqrt %201 : vector<16x1xf32>
      %203 = vector.broadcast %202 : vector<16x1xf32> to vector<16x32xf32>
      %204 = arith.mulf %199, %203 : vector<16x32xf32>
      %205 = vector.broadcast %185 : vector<1x32xf32> to vector<16x32xf32>
      %206 = arith.mulf %205, %204 : vector<16x32xf32>
      %207 = vector.broadcast %186 : vector<1x32xf32> to vector<16x32xf32>
      %208 = arith.addf %206, %207 : vector<16x32xf32>
      %c0_84 = arith.constant 0 : index
      %c0_85 = arith.constant 0 : index
      %209 = vector.load %arg16[%c0_84, %c0_85] : memref<16x32xf32, #tpu.memory_space<vmem>>, vector<16x32xf32>
      tpu.vector_store %arg16[%c0_84, %c0_85], %208 {strides = array<i32>} : memref<16x32xf32, #tpu.memory_space<vmem>>, vector<16x32xf32>,
    } else {
    }
    return
  }
  func.func @transform_0(%arg0: i32) -> (i32, i32) {
    %c0_i32 = arith.constant 0 : i32
    %c0_i32_0 = arith.constant 0 : i32
    %c0_i32_1 = arith.constant 0 : i32
    return %c0_i32, %c0_i32_0 : i32, i32
  }
  func.func @transform_1(%arg0: i32) -> (i32, i32, i32) {
    %c0_i32 = arith.constant 0 : i32
    %c0_i32_0 = arith.constant 0 : i32
    %c0_i32_1 = arith.constant 0 : i32
    return %arg0, %c0_i32, %c0_i32_0 : i32, i32, i32
  }
  func.func @transform_2(%arg0: i32) -> (i32, i32, i32) {
    %c0_i32 = arith.constant 0 : i32
    %c0_i32_0 = arith.constant 0 : i32
    %c0_i32_1 = arith.constant 0 : i32
    return %arg0, %c0_i32, %c0_i32_0 : i32, i32, i32
  }
  func.func @transform_3(%arg0: i32) -> (i32, i32, i32) {
    %c0_i32 = arith.constant 0 : i32
    %c0_i32_0 = arith.constant 0 : i32
    %c0_i32_1 = arith.constant 0 : i32
    return %arg0, %c0_i32, %c0_i32_0 : i32, i32, i32
  }
  func.func @transform_4(%arg0: i32) -> (i32, i32, i32) {
    %c0_i32 = arith.constant 0 : i32
    %c0_i32_0 = arith.constant 0 : i32
    %c0_i32_1 = arith.constant 0 : i32
    return %arg0, %c0_i32, %c0_i32_0 : i32, i32, i32
  }
  func.func @transform_5(%arg0: i32) -> (i32, i32, i32) {
    %c0_i32 = arith.constant 0 : i32
    %c0_i32_0 = arith.constant 0 : i32
    %c0_i32_1 = arith.constant 0 : i32
    return %arg0, %c0_i32, %c0_i32_0 : i32, i32, i32
  }
  func.func @transform_6(%arg0: i32) -> (i32, i32, i32) {
    %c0_i32 = arith.constant 0 : i32
    %c0_i32_0 = arith.constant 0 : i32
    %c0_i32_1 = arith.constant 0 : i32
    return %arg0, %c0_i32, %c0_i32_0 : i32, i32, i32
  }
  func.func @transform_7(%arg0: i32) -> (i32, i32, i32) {
    %c0_i32 = arith.constant 0 : i32
    %c0_i32_0 = arith.constant 0 : i32
    %c0_i32_1 = arith.constant 0 : i32
    return %arg0, %c0_i32, %c0_i32_0 : i32, i32, i32
  }
  func.func @transform_8(%arg0: i32) -> (i32, i32, i32) {
    %c0_i32 = arith.constant 0 : i32
    %c0_i32_0 = arith.constant 0 : i32
    %c0_i32_1 = arith.constant 0 : i32
    return %arg0, %c0_i32, %c0_i32_0 : i32, i32, i32
  }
  func.func @transform_9(%arg0: i32) -> (i32, i32, i32) {
    %c0_i32 = arith.constant 0 : i32
    %c0_i32_0 = arith.constant 0 : i32
    %c0_i32_1 = arith.constant 0 : i32
    return %arg0, %c0_i32, %c0_i32_0 : i32, i32, i32
  }
  func.func @transform_10(%arg0: i32) -> (i32, i32, i32) {
    %c0_i32 = arith.constant 0 : i32
    %c0_i32_0 = arith.constant 0 : i32
    %c0_i32_1 = arith.constant 0 : i32
    return %arg0, %c0_i32, %c0_i32_0 : i32, i32, i32
  }
  func.func @transform_11(%arg0: i32) -> (i32, i32, i32) {
    %c0_i32 = arith.constant 0 : i32
    %c0_i32_0 = arith.constant 0 : i32
    %c0_i32_1 = arith.constant 0 : i32
    return %arg0, %c0_i32, %c0_i32_0 : i32, i32, i32
  }
  func.func @transform_12(%arg0: i32) -> (i32, i32, i32) {
    %c0_i32 = arith.constant 0 : i32
    %c0_i32_0 = arith.constant 0 : i32
    %c0_i32_1 = arith.constant 0 : i32
    return %arg0, %c0_i32, %c0_i32_0 : i32, i32, i32
  }
  func.func @transform_13(%arg0: i32) -> (i32, i32) {
    %c0_i32 = arith.constant 0 : i32
    %c0_i32_0 = arith.constant 0 : i32
    %c0_i32_1 = arith.constant 0 : i32
    return %c0_i32, %c0_i32_0 : i32, i32
  }
  func.func @transform_14(%arg0: i32) -> (i32, i32) {
    %c0_i32 = arith.constant 0 : i32
    %c0_i32_0 = arith.constant 0 : i32
    %c0_i32_1 = arith.constant 0 : i32
    return %c0_i32, %c0_i32_0 : i32, i32
  }
  func.func @transform_15(%arg0: i32) -> (i32, i32) {
    %c0_i32 = arith.constant 0 : i32
    %c0_i32_0 = arith.constant 0 : i32
    %c0_i32_1 = arith.constant 0 : i32
    return %c0_i32, %c0_i32_0 : i32, i32
  }
}

</mosaic_0001>

<llo_original>
// kernel: tpu_custom_call.1
$region0: #{tpu_custom_call.1}
  #allocation0 [shape = 'u32[]', space=smem, size = 0x4, offset = 0x4, fixed_abs, tag = 'smem constant byte address 0x4 - core index']
  #allocation1 [shape = 'u32[144,128]{1,0:T(1,128)}', space=vmem, size = 0x12000, scoped, tag = 'internal scratch']
  %s0 = inlined_call_operand.hbm [shape: f32[16,32], index: 0, kind: input, shape index: {}]
  %s1 = inlined_call_operand.hbm [shape: f32[4,1,32], index: 1, kind: input, shape index: {}]
  %s2 = inlined_call_operand.hbm [shape: f32[4,1,32], index: 2, kind: input, shape index: {}]
  %s3 = inlined_call_operand.hbm [shape: bf16[4,32,96], index: 3, kind: input, shape index: {}]
  %s4 = inlined_call_operand.hbm [shape: f32[4,1,96], index: 4, kind: input, shape index: {}]
  %s5 = inlined_call_operand.hbm [shape: bf16[4,32,32], index: 5, kind: input, shape index: {}]
  %s6 = inlined_call_operand.hbm [shape: f32[4,1,32], index: 6, kind: input, shape index: {}]
  %s7 = inlined_call_operand.hbm [shape: f32[4,1,32], index: 7, kind: input, shape index: {}]
  %s8 = inlined_call_operand.hbm [shape: f32[4,1,32], index: 8, kind: input, shape index: {}]
  %s9 = inlined_call_operand.hbm [shape: bf16[4,32,64], index: 9, kind: input, shape index: {}]
  %s10 = inlined_call_operand.hbm [shape: f32[4,1,64], index: 10, kind: input, shape index: {}]
  %s11 = inlined_call_operand.hbm [shape: bf16[4,64,32], index: 11, kind: input, shape index: {}]
  %s12 = inlined_call_operand.hbm [shape: f32[4,1,32], index: 12, kind: input, shape index: {}]
  %s13 = inlined_call_operand.hbm [shape: f32[1,32], index: 13, kind: input, shape index: {}]
  %s14 = inlined_call_operand.hbm [shape: f32[1,32], index: 14, kind: input, shape index: {}]
  %s15 = inlined_call_operand.hbm [shape: f32[16,32], index: 15, kind: output, shape index: {}]
  %s16 = sld [smem:[#allocation0]]
  $region165: #{tpu_custom_call.1} parent=0
    _
  %s18 = ssub.s32 1, %s16
  %s19 = scalar_select 0, %s18, %s16
  $region1: #{tpu_custom_call.1} parent=0
    #allocation2 [shape = 'u8[8192]{0}', space=vmem, size = 0x2000, scoped, tag = 'input window, operand 0, single buffered']
    #allocation3 [shape = 's32[2]{0}', space=sflag, size = 0x8, scoped, tag = 'scoped memory for tpu_custom_call.1']
    #allocation4 [shape = 's32[2]{0}', space=sflag, size = 0x8, scoped, tag = 'scoped memory for tpu_custom_call.1']
    #allocation5 [shape = 'u8[1024]{0}', space=vmem, size = 0x400, scoped, tag = 'input window, operand 1']
    #allocation6 [shape = 's32[2]{0}', space=sflag, size = 0x8, scoped, tag = 'scoped memory for tpu_custom_call.1']
    #allocation7 [shape = 'u8[1024]{0}', space=vmem, size = 0x400, scoped, tag = 'input window, operand 2']
    #allocation8 [shape = 'u8[16384]{0}', space=vmem, size = 0x4000, scoped, tag = 'input window, operand 3']
    #allocation9 [shape = 's32[2]{0}', space=sflag, size = 0x8, scoped, tag = 'scoped memory for tpu_custom_call.1']
    #allocation10 [shape = 'u8[1024]{0}', space=vmem, size = 0x400, scoped, tag = 'input window, operand 4']
    #allocation11 [shape = 'u8[16384]{0}', space=vmem, size = 0x4000, scoped, tag = 'input window, operand 5']
    #allocation12 [shape = 's32[2]{0}', space=sflag, size = 0x8, scoped, tag = 'scoped memory for tpu_custom_call.1']
    #allocation13 [shape = 'u8[1024]{0}', space=vmem, size = 0x400, scoped, tag = 'input window, operand 6']
    #allocation14 [shape = 'u8[1024]{0}', space=vmem, size = 0x400, scoped, tag = 'input window, operand 7']
    #allocation15 [shape = 's32[2]{0}', space=sflag, size = 0x8, scoped, tag = 'scoped memory for tpu_custom_call.1']
    #allocation16 [shape = 'u8[1024]{0}', space=vmem, size = 0x400, scoped, tag = 'input window, operand 8']
    #allocation17 [shape = 'u8[16384]{0}', space=vmem, size = 0x4000, scoped, tag = 'input window, operand 9']
    #allocation18 [shape = 's32[2]{0}', space=sflag, size = 0x8, scoped, tag = 'scoped memory for tpu_custom_call.1']
    #allocation19 [shape = 'u8[1024]{0}', space=vmem, size = 0x400, scoped, tag = 'input window, operand 10']
    #allocation20 [shape = 'u8[32768]{0}', space=vmem, size = 0x8000, scoped, tag = 'input window, operand 11']
    #allocation21 [shape = 's32[2]{0}', space=sflag, size = 0x8, scoped, tag = 'scoped memory for tpu_custom_call.1']
    #allocation22 [shape = 'u8[1024]{0}', space=vmem, size = 0x400, scoped, tag = 'input window, operand 12']
    #allocation23 [shape = 'u8[512]{0}', space=vmem, size = 0x400, scoped, tag = 'input window, operand 13, single buffered']
    #allocation24 [shape = 's32[1]{0}', space=sflag, size = 0x4, scoped, tag = 'scoped memory for tpu_custom_call.1']
    #allocation25 [shape = 'u8[512]{0}', space=vmem, size = 0x400, scoped, tag = 'input window, operand 14, single buffered']
    #allocation26 [shape = 'u8[8192]{0}', space=vmem, size = 0x2000, scoped, tag = 'output window, operand 0, single buffered']
    %20 = vsyncpa [#allocation3], 0
    %21 = vsyncpa [#allocation6], 0
    %s22 = scalar_lea.sflag [#allocation6], 1
    %23 = vsyncpa %s22, 0
    %24 = vsyncpa [#allocation9], 0
    %s25 = scalar_lea.sflag [#allocation9], 1
    %26 = vsyncpa %s25, 0
    %27 = vsyncpa [#allocation12], 0
    %s28 = scalar_lea.sflag [#allocation12], 1
    %29 = vsyncpa %s28, 0
    %30 = vsyncpa [#allocation15], 0
    %s31 = scalar_lea.sflag [#allocation15], 1
    %32 = vsyncpa %s31, 0
    %33 = vsyncpa [#allocation18], 0
    %s34 = scalar_lea.sflag [#allocation18], 1
    %35 = vsyncpa %s34, 0
    %36 = vsyncpa [#allocation21], 0
    %s37 = scalar_lea.sflag [#allocation21], 1
    %38 = vsyncpa %s37, 0
    %39 = vsyncpa [#allocation24], 0
    %40 = vsyncpa [#allocation4], 0
    loop: start=0, step=1, limit=6
    $region2: #{tpu_custom_call.1} parent=1 // loop_pre_header
      _
    $region3: #{tpu_custom_call.1} parent=1 // loop_header
      %s42 = sphi 0, %s46
      %p43 = scmp.ge.s32.totalorder %s42, 6
      %s50 = sphi 0, %s50
      %s52 = sphi 0, %s50
      %s53 = sphi 0, %s52
      %s67 = sphi 0, %s53
      %s73 = sphi 0, %s75
      %s76 = sphi 0, %s73
      %s77 = sphi 0, %s76
      %s93 = sphi 0, %s77
      %s99 = sphi 0, %s101
      %s102 = sphi 0, %s99
      %s103 = sphi 0, %s102
      %s119 = sphi 0, %s103
      %s125 = sphi 0, %s127
      %s128 = sphi 0, %s125
      %s129 = sphi 0, %s128
      %s145 = sphi 0, %s129
      %s151 = sphi 0, %s153
      %s154 = sphi 0, %s151
      %s155 = sphi 0, %s154
      %s171 = sphi 0, %s155
      %s177 = sphi 0, %s179
      %s180 = sphi 0, %s177
      %s181 = sphi 0, %s180
      %s197 = sphi 0, %s181
      %s203 = sphi 0, %s205
      %s206 = sphi 0, %s203
      %s207 = sphi 0, %s206
      %s223 = sphi 0, %s207
      %s229 = sphi 0, %s231
      %s232 = sphi 0, %s229
      %s233 = sphi 0, %s232
      %s249 = sphi 0, %s233
      %s255 = sphi 0, %s257
      %s258 = sphi 0, %s255
      %s259 = sphi 0, %s258
      %s275 = sphi 0, %s259
      %s281 = sphi 0, %s283
      %s284 = sphi 0, %s281
      %s285 = sphi 0, %s284
      %s301 = sphi 0, %s285
      %s307 = sphi 0, %s309
      %s310 = sphi 0, %s307
      %s311 = sphi 0, %s310
      %s327 = sphi 0, %s311
      %s333 = sphi 0, %s335
      %s336 = sphi 0, %s333
      %s337 = sphi 0, %s336
      %s353 = sphi 0, %s337
      %s359 = sphi 0, %s361
      %s362 = sphi 0, %s359
      %s363 = sphi 0, %s362
      %s379 = sphi 0, %s363
      %s383 = sphi 0, %s383
      %s385 = sphi 0, %s383
      %s386 = sphi 0, %s385
      %s400 = sphi 0, %s386
      %s404 = sphi 0, %s404
      %s406 = sphi 0, %s404
      %s407 = sphi 0, %s406
      %s421 = sphi 0, %s407
      %s425 = sphi 0, %s425
      %s427 = sphi 0, %s425
      %s428 = sphi 0, %s427
      %s442 = sphi 0, %s428
    $region4: #{tpu_custom_call.1} parent=1 // loop_header_branch
      %45 = sbr.rel (%p43) target = $region8
    $region5: #{tpu_custom_call.1} parent=1 // loop_body
      %s47 = ssub.s32 %s42, 1
      %s48 = ssub.s32 %s42, 2
      %s49 = sadd.s32 %s42, 1
      %s51 = sadd.s32 %s50, 1
      %p54 = scmp.eq.s32.totalorder %s42, 3
      %p55 = scmp.ne.s32.totalorder %s50, %s52
      %p56 = scmp.eq.s32.totalorder %s42, 0
      %p57 = por %p55, %p56
      %p58 = scmp.ne.s32.totalorder %s50, %s52
      %p59 = scmp.eq.s32.totalorder %s47, 3
      %p60 = por %p58, %p59
      %p61 = scmp.ne.s32.totalorder %s52, %s53
      %p62 = scmp.eq.s32.totalorder %s47, 0
      %p63 = por %p61, %p62
      %p64 = scmp.ne.s32.totalorder %s52, %s53
      %p65 = scmp.eq.s32.totalorder %s48, 3
      %p66 = por %p64, %p65
      %p68 = scmp.ne.s32.totalorder %s53, %s67
      %p69 = scmp.eq.s32.totalorder %s48, 0
      %p70 = por %p68, %p69
      %s71 = ssub.s32 %s42, %s49
      %p72 = scmp.eq.s32.totalorder %s71, 0
      %s74 = sadd.s32 %s73, 1
      %s75 = scalar_select %p72, %s73, %s74
      %p78 = pneg %p72
      %p79 = scmp.eq.s32.totalorder %s42, 3
      %p80 = por %p78, %p79
      %p81 = scmp.ne.s32.totalorder %s73, %s76
      %p82 = scmp.eq.s32.totalorder %s42, 0
      %p83 = por %p81, %p82
      %p84 = scmp.ne.s32.totalorder %s73, %s76
      %p85 = scmp.eq.s32.totalorder %s47, 3
      %p86 = por %p84, %p85
      %p87 = scmp.ne.s32.totalorder %s76, %s77
      %p88 = scmp.eq.s32.totalorder %s47, 0
      %p89 = por %p87, %p88
      %p90 = scmp.ne.s32.totalorder %s76, %s77
      %p91 = scmp.eq.s32.totalorder %s48, 3
      %p92 = por %p90, %p91
      %p94 = scmp.ne.s32.totalorder %s77, %s93
      %p95 = scmp.eq.s32.totalorder %s48, 0
      %p96 = por %p94, %p95
      %s97 = ssub.s32 %s42, %s49
      %p98 = scmp.eq.s32.totalorder %s97, 0
      %s100 = sadd.s32 %s99, 1
      %s101 = scalar_select %p98, %s99, %s100
      %p104 = pneg %p98
      %p105 = scmp.eq.s32.totalorder %s42, 3
      %p106 = por %p104, %p105
      %p107 = scmp.ne.s32.totalorder %s99, %s102
      %p108 = scmp.eq.s32.totalorder %s42, 0
      %p109 = por %p107, %p108
      %p110 = scmp.ne.s32.totalorder %s99, %s102
      %p111 = scmp.eq.s32.totalorder %s47, 3
      %p112 = por %p110, %p111
      %p113 = scmp.ne.s32.totalorder %s102, %s103
      %p114 = scmp.eq.s32.totalorder %s47, 0
      %p115 = por %p113, %p114
      %p116 = scmp.ne.s32.totalorder %s102, %s103
      %p117 = scmp.eq.s32.totalorder %s48, 3
      %p118 = por %p116, %p117
      %p120 = scmp.ne.s32.totalorder %s103, %s119
      %p121 = scmp.eq.s32.totalorder %s48, 0
      %p122 = por %p120, %p121
      %s123 = ssub.s32 %s42, %s49
      %p124 = scmp.eq.s32.totalorder %s123, 0
      %s126 = sadd.s32 %s125, 1
      %s127 = scalar_select %p124, %s125, %s126
      %p130 = pneg %p124
      %p131 = scmp.eq.s32.totalorder %s42, 3
      %p132 = por %p130, %p131
      %p133 = scmp.ne.s32.totalorder %s125, %s128
      %p134 = scmp.eq.s32.totalorder %s42, 0
      %p135 = por %p133, %p134
      %p136 = scmp.ne.s32.totalorder %s125, %s128
      %p137 = scmp.eq.s32.totalorder %s47, 3
      %p138 = por %p136, %p137
      %p139 = scmp.ne.s32.totalorder %s128, %s129
      %p140 = scmp.eq.s32.totalorder %s47, 0
      %p141 = por %p139, %p140
      %p142 = scmp.ne.s32.totalorder %s128, %s129
      %p143 = scmp.eq.s32.totalorder %s48, 3
      %p144 = por %p142, %p143
      %p146 = scmp.ne.s32.totalorder %s129, %s145
      %p147 = scmp.eq.s32.totalorder %s48, 0
      %p148 = por %p146, %p147
      %s149 = ssub.s32 %s42, %s49
      %p150 = scmp.eq.s32.totalorder %s149, 0
      %s152 = sadd.s32 %s151, 1
      %s153 = scalar_select %p150, %s151, %s152
      %p156 = pneg %p150
      %p157 = scmp.eq.s32.totalorder %s42, 3
      %p158 = por %p156, %p157
      %p159 = scmp.ne.s32.totalorder %s151, %s154
      %p160 = scmp.eq.s32.totalorder %s42, 0
      %p161 = por %p159, %p160
      %p162 = scmp.ne.s32.totalorder %s151, %s154
      %p163 = scmp.eq.s32.totalorder %s47, 3
      %p164 = por %p162, %p163
      %p165 = scmp.ne.s32.totalorder %s154, %s155
      %p166 = scmp.eq.s32.totalorder %s47, 0
      %p167 = por %p165, %p166
      %p168 = scmp.ne.s32.totalorder %s154, %s155
      %p169 = scmp.eq.s32.totalorder %s48, 3
      %p170 = por %p168, %p169
      %p172 = scmp.ne.s32.totalorder %s155, %s171
      %p173 = scmp.eq.s32.totalorder %s48, 0
      %p174 = por %p172, %p173
      %s175 = ssub.s32 %s42, %s49
      %p176 = scmp.eq.s32.totalorder %s175, 0
      %s178 = sadd.s32 %s177, 1
      %s179 = scalar_select %p176, %s177, %s178
      %p182 = pneg %p176
      %p183 = scmp.eq.s32.totalorder %s42, 3
      %p184 = por %p182, %p183
      %p185 = scmp.ne.s32.totalorder %s177, %s180
      %p186 = scmp.eq.s32.totalorder %s42, 0
      %p187 = por %p185, %p186
      %p188 = scmp.ne.s32.totalorder %s177, %s180
      %p189 = scmp.eq.s32.totalorder %s47, 3
      %p190 = por %p188, %p189
      %p191 = scmp.ne.s32.totalorder %s180, %s181
      %p192 = scmp.eq.s32.totalorder %s47, 0
      %p193 = por %p191, %p192
      %p194 = scmp.ne.s32.totalorder %s180, %s181
      %p195 = scmp.eq.s32.totalorder %s48, 3
      %p196 = por %p194, %p195
      %p198 = scmp.ne.s32.totalorder %s181, %s197
      %p199 = scmp.eq.s32.totalorder %s48, 0
      %p200 = por %p198, %p199
      %s201 = ssub.s32 %s42, %s49
      %p202 = scmp.eq.s32.totalorder %s201, 0
      %s204 = sadd.s32 %s203, 1
      %s205 = scalar_select %p202, %s203, %s204
      %p208 = pneg %p202
      %p209 = scmp.eq.s32.totalorder %s42, 3
      %p210 = por %p208, %p209
      %p211 = scmp.ne.s32.totalorder %s203, %s206
      %p212 = scmp.eq.s32.totalorder %s42, 0
      %p213 = por %p211, %p212
      %p214 = scmp.ne.s32.totalorder %s203, %s206
      %p215 = scmp.eq.s32.totalorder %s47, 3
      %p216 = por %p214, %p215
      %p217 = scmp.ne.s32.totalorder %s206, %s207
      %p218 = scmp.eq.s32.totalorder %s47, 0
      %p219 = por %p217, %p218
      %p220 = scmp.ne.s32.totalorder %s206, %s207
      %p221 = scmp.eq.s32.totalorder %s48, 3
      %p222 = por %p220, %p221
      %p224 = scmp.ne.s32.totalorder %s207, %s223
      %p225 = scmp.eq.s32.totalorder %s48, 0
      %p226 = por %p224, %p225
      %s227 = ssub.s32 %s42, %s49
      %p228 = scmp.eq.s32.totalorder %s227, 0
      %s230 = sadd.s32 %s229, 1
      %s231 = scalar_select %p228, %s229, %s230
      %p234 = pneg %p228
      %p235 = scmp.eq.s32.totalorder %s42, 3
      %p236 = por %p234, %p235
      %p237 = scmp.ne.s32.totalorder %s229, %s232
      %p238 = scmp.eq.s32.totalorder %s42, 0
      %p239 = por %p237, %p238
      %p240 = scmp.ne.s32.totalorder %s229, %s232
      %p241 = scmp.eq.s32.totalorder %s47, 3
      %p242 = por %p240, %p241
      %p243 = scmp.ne.s32.totalorder %s232, %s233
      %p244 = scmp.eq.s32.totalorder %s47, 0
      %p245 = por %p243, %p244
      %p246 = scmp.ne.s32.totalorder %s232, %s233
      %p247 = scmp.eq.s32.totalorder %s48, 3
      %p248 = por %p246, %p247
      %p250 = scmp.ne.s32.totalorder %s233, %s249
      %p251 = scmp.eq.s32.totalorder %s48, 0
      %p252 = por %p250, %p251
      %s253 = ssub.s32 %s42, %s49
      %p254 = scmp.eq.s32.totalorder %s253, 0
      %s256 = sadd.s32 %s255, 1
      %s257 = scalar_select %p254, %s255, %s256
      %p260 = pneg %p254
      %p261 = scmp.eq.s32.totalorder %s42, 3
      %p262 = por %p260, %p261
      %p263 = scmp.ne.s32.totalorder %s255, %s258
      %p264 = scmp.eq.s32.totalorder %s42, 0
      %p265 = por %p263, %p264
      %p266 = scmp.ne.s32.totalorder %s255, %s258
      %p267 = scmp.eq.s32.totalorder %s47, 3
      %p268 = por %p266, %p267
      %p269 = scmp.ne.s32.totalorder %s258, %s259
      %p270 = scmp.eq.s32.totalorder %s47, 0
      %p271 = por %p269, %p270
      %p272 = scmp.ne.s32.totalorder %s258, %s259
      %p273 = scmp.eq.s32.totalorder %s48, 3
      %p274 = por %p272, %p273
      %p276 = scmp.ne.s32.totalorder %s259, %s275
      %p277 = scmp.eq.s32.totalorder %s48, 0
      %p278 = por %p276, %p277
      %s279 = ssub.s32 %s42, %s49
      %p280 = scmp.eq.s32.totalorder %s279, 0
      %s282 = sadd.s32 %s281, 1
      %s283 = scalar_select %p280, %s281, %s282
      %p286 = pneg %p280
      %p287 = scmp.eq.s32.totalorder %s42, 3
      %p288 = por %p286, %p287
      %p289 = scmp.ne.s32.totalorder %s281, %s284
      %p290 = scmp.eq.s32.totalorder %s42, 0
      %p291 = por %p289, %p290
      %p292 = scmp.ne.s32.totalorder %s281, %s284
      %p293 = scmp.eq.s32.totalorder %s47, 3
      %p294 = por %p292, %p293
      %p295 = scmp.ne.s32.totalorder %s284, %s285
      %p296 = scmp.eq.s32.totalorder %s47, 0
      %p297 = por %p295, %p296
      %p298 = scmp.ne.s32.totalorder %s284, %s285
      %p299 = scmp.eq.s32.totalorder %s48, 3
      %p300 = por %p298, %p299
      %p302 = scmp.ne.s32.totalorder %s285, %s301
      %p303 = scmp.eq.s32.totalorder %s48, 0
      %p304 = por %p302, %p303
      %s305 = ssub.s32 %s42, %s49
      %p306 = scmp.eq.s32.totalorder %s305, 0
      %s308 = sadd.s32 %s307, 1
      %s309 = scalar_select %p306, %s307, %s308
      %p312 = pneg %p306
      %p313 = scmp.eq.s32.totalorder %s42, 3
      %p314 = por %p312, %p313
      %p315 = scmp.ne.s32.totalorder %s307, %s310
      %p316 = scmp.eq.s32.totalorder %s42, 0
      %p317 = por %p315, %p316
      %p318 = scmp.ne.s32.totalorder %s307, %s310
      %p319 = scmp.eq.s32.totalorder %s47, 3
      %p320 = por %p318, %p319
      %p321 = scmp.ne.s32.totalorder %s310, %s311
      %p322 = scmp.eq.s32.totalorder %s47, 0
      %p323 = por %p321, %p322
      %p324 = scmp.ne.s32.totalorder %s310, %s311
      %p325 = scmp.eq.s32.totalorder %s48, 3
      %p326 = por %p324, %p325
      %p328 = scmp.ne.s32.totalorder %s311, %s327
      %p329 = scmp.eq.s32.totalorder %s48, 0
      %p330 = por %p328, %p329
      %s331 = ssub.s32 %s42, %s49
      %p332 = scmp.eq.s32.totalorder %s331, 0
      %s334 = sadd.s32 %s333, 1
      %s335 = scalar_select %p332, %s333, %s334
      %p338 = pneg %p332
      %p339 = scmp.eq.s32.totalorder %s42, 3
      %p340 = por %p338, %p339
      %p341 = scmp.ne.s32.totalorder %s333, %s336
      %p342 = scmp.eq.s32.totalorder %s42, 0
      %p343 = por %p341, %p342
      %p344 = scmp.ne.s32.totalorder %s333, %s336
      %p345 = scmp.eq.s32.totalorder %s47, 3
      %p346 = por %p344, %p345
      %p347 = scmp.ne.s32.totalorder %s336, %s337
      %p348 = scmp.eq.s32.totalorder %s47, 0
      %p349 = por %p347, %p348
      %p350 = scmp.ne.s32.totalorder %s336, %s337
      %p351 = scmp.eq.s32.totalorder %s48, 3
      %p352 = por %p350, %p351
      %p354 = scmp.ne.s32.totalorder %s337, %s353
      %p355 = scmp.eq.s32.totalorder %s48, 0
      %p356 = por %p354, %p355
      %s357 = ssub.s32 %s42, %s49
      %p358 = scmp.eq.s32.totalorder %s357, 0
      %s360 = sadd.s32 %s359, 1
      %s361 = scalar_select %p358, %s359, %s360
      %p364 = pneg %p358
      %p365 = scmp.eq.s32.totalorder %s42, 3
      %p366 = por %p364, %p365
      %p367 = scmp.ne.s32.totalorder %s359, %s362
      %p368 = scmp.eq.s32.totalorder %s42, 0
      %p369 = por %p367, %p368
      %p370 = scmp.ne.s32.totalorder %s359, %s362
      %p371 = scmp.eq.s32.totalorder %s47, 3
      %p372 = por %p370, %p371
      %p373 = scmp.ne.s32.totalorder %s362, %s363
      %p374 = scmp.eq.s32.totalorder %s47, 0
      %p375 = por %p373, %p374
      %p376 = scmp.ne.s32.totalorder %s362, %s363
      %p377 = scmp.eq.s32.totalorder %s48, 3
      %p378 = por %p376, %p377
      %p380 = scmp.ne.s32.totalorder %s363, %s379
      %p381 = scmp.eq.s32.totalorder %s48, 0
      %p382 = por %p380, %p381
      %s384 = sadd.s32 %s383, 1
      %p387 = scmp.eq.s32.totalorder %s42, 3
      %p388 = scmp.ne.s32.totalorder %s383, %s385
      %p389 = scmp.eq.s32.totalorder %s42, 0
      %p390 = por %p388, %p389
      %p391 = scmp.ne.s32.totalorder %s383, %s385
      %p392 = scmp.eq.s32.totalorder %s47, 3
      %p393 = por %p391, %p392
      %p394 = scmp.ne.s32.totalorder %s385, %s386
      %p395 = scmp.eq.s32.totalorder %s47, 0
      %p396 = por %p394, %p395
      %p397 = scmp.ne.s32.totalorder %s385, %s386
      %p398 = scmp.eq.s32.totalorder %s48, 3
      %p399 = por %p397, %p398
      %p401 = scmp.ne.s32.totalorder %s386, %s400
      %p402 = scmp.eq.s32.totalorder %s48, 0
      %p403 = por %p401, %p402
      %s405 = sadd.s32 %s404, 1
      %p408 = scmp.eq.s32.totalorder %s42, 3
      %p409 = scmp.ne.s32.totalorder %s404, %s406
      %p410 = scmp.eq.s32.totalorder %s42, 0
      %p411 = por %p409, %p410
      %p412 = scmp.ne.s32.totalorder %s404, %s406
      %p413 = scmp.eq.s32.totalorder %s47, 3
      %p414 = por %p412, %p413
      %p415 = scmp.ne.s32.totalorder %s406, %s407
      %p416 = scmp.eq.s32.totalorder %s47, 0
      %p417 = por %p415, %p416
      %p418 = scmp.ne.s32.totalorder %s406, %s407
      %p419 = scmp.eq.s32.totalorder %s48, 3
      %p420 = por %p418, %p419
      %p422 = scmp.ne.s32.totalorder %s407, %s421
      %p423 = scmp.eq.s32.totalorder %s48, 0
      %p424 = por %p422, %p423
      %s426 = sadd.s32 %s425, 1
      %p429 = scmp.eq.s32.totalorder %s42, 3
      %p430 = scmp.ne.s32.totalorder %s425, %s427
      %p431 = scmp.eq.s32.totalorder %s42, 0
      %p432 = por %p430, %p431
      %p433 = scmp.ne.s32.totalorder %s425, %s427
      %p434 = scmp.eq.s32.totalorder %s47, 3
      %p435 = por %p433, %p434
      %p436 = scmp.ne.s32.totalorder %s427, %s428
      %p437 = scmp.eq.s32.totalorder %s47, 0
      %p438 = por %p436, %p437
      %p439 = scmp.ne.s32.totalorder %s427, %s428
      %p440 = scmp.eq.s32.totalorder %s48, 3
      %p441 = por %p439, %p440
      %p443 = scmp.ne.s32.totalorder %s428, %s442
      %p444 = scmp.eq.s32.totalorder %s48, 0
      %p445 = por %p443, %p444
      %p446 = scmp.le.s32.totalorder 1, %s42
      %p447 = scmp.lt.s32.totalorder %s42, 5
      %p448 = pnand %p446, %p447
      %p449 = pneg %p448
      // Predicated region
      $region9: #{tpu_custom_call.1} parent=5 // pred_check
        _
      $region10: #{tpu_custom_call.1} parent=5 // pred_check_branch
        %451 = sbr.rel (%p448) target = $region12
      $region11: #{tpu_custom_call.1} parent=5 // pred_region
        %s452 = ssub.s32 %s42, 1
        // Predicated region
        $region13: #{tpu_custom_call.1} parent=11 // pred_check
          %p453 = pneg %p63
        $region14: #{tpu_custom_call.1} parent=11 // pred_check_branch
          %455 = sbr.rel (%p453) target = $region16
        $region15: #{tpu_custom_call.1} parent=11 // pred_region
          %s457 = ssub.s32 256, 256
          %458 = vsyncadd [#allocation3], %s457
          %s459 = sshll.u32 [#allocation2], 4
          %s460 = int_to_ptr.vmem [resolvable:$true] %s459
          %465 = dma.hbm_to_vmem [thread:$0]  %s0, 256, %s460, [#allocation3], 128, 128, 8
        $region16: #{tpu_custom_call.1} parent=11 // pred_fallthru
          _
        // Predicated region
        $region17: #{tpu_custom_call.1} parent=11 // pred_check
          %p466 = pneg %p396
        $region18: #{tpu_custom_call.1} parent=11 // pred_check_branch
          %468 = sbr.rel (%p466) target = $region20
        $region19: #{tpu_custom_call.1} parent=11 // pred_region
          %s470 = ssub.s32 16, 16
          %471 = vsyncadd [#allocation24], %s470
          %s473 = sshll.u32 [#allocation23], 4
          %s474 = int_to_ptr.vmem [resolvable:$true] %s473
          %476 = dma.hbm_to_vmem [thread:$0]  %s13, 16, %s474, [#allocation24]
        $region20: #{tpu_custom_call.1} parent=11 // pred_fallthru
          _
        // Predicated region
        $region21: #{tpu_custom_call.1} parent=11 // pred_check
          %p477 = pneg %p417
        $region22: #{tpu_custom_call.1} parent=11 // pred_check_branch
          %479 = sbr.rel (%p477) target = $region24
        $region23: #{tpu_custom_call.1} parent=11 // pred_region
          %s481 = ssub.s32 16, 16
          %482 = vsyncadd [#allocation24], %s481
          %s484 = sshll.u32 [#allocation25], 4
          %s485 = int_to_ptr.vmem [resolvable:$true] %s484
          %487 = dma.hbm_to_vmem [thread:$0]  %s14, 16, %s485, [#allocation24]
        $region24: #{tpu_custom_call.1} parent=11 // pred_fallthru
          _
      $region12: #{tpu_custom_call.1} parent=5 // pred_fallthru
        _
      %p488 = scmp.lt.s32.totalorder %s42, 4
      // Predicated region
      $region25: #{tpu_custom_call.1} parent=5 // pred_check
        %p489 = pneg %p488
      $region26: #{tpu_custom_call.1} parent=5 // pred_check_branch
        %491 = sbr.rel (%p489) target = $region28
      $region27: #{tpu_custom_call.1} parent=5 // pred_region
        // Predicated region
        $region29: #{tpu_custom_call.1} parent=27 // pred_check
          %p492 = pneg %p83
        $region30: #{tpu_custom_call.1} parent=27 // pred_check_branch
          %494 = sbr.rel (%p492) target = $region32
        $region31: #{tpu_custom_call.1} parent=27 // pred_region
          %s495 = sand.u32 %s42, 1
          %s496 = scalar_lea.sflag [#allocation6], %s495
          %s497 = sand.u32 %s73, 1
          %s498 = scalar_lea.vmem [#allocation5], %s497
          %s500 = ssub.s32 16, 16
          %501 = vsyncadd %s496, %s500
          %s502 = smul.addr %s42, 16
          %s503 = scalar_lea.hbm %s1, %s502
          %s505 = sshll.u32 %s498, 4
          %s506 = int_to_ptr.vmem [resolvable:$true] %s505
          %508 = dma.hbm_to_vmem [thread:$0]  %s503, 16, %s506, %s496
        $region32: #{tpu_custom_call.1} parent=27 // pred_fallthru
          _
        // Predicated region
        $region33: #{tpu_custom_call.1} parent=27 // pred_check
          %p509 = pneg %p109
        $region34: #{tpu_custom_call.1} parent=27 // pred_check_branch
          %511 = sbr.rel (%p509) target = $region36
        $region35: #{tpu_custom_call.1} parent=27 // pred_region
          %s512 = sand.u32 %s42, 1
          %s513 = scalar_lea.sflag [#allocation6], %s512
          %s514 = sand.u32 %s99, 1
          %s515 = scalar_lea.vmem [#allocation7], %s514
          %s517 = ssub.s32 16, 16
          %518 = vsyncadd %s513, %s517
          %s519 = smul.addr %s42, 16
          %s520 = scalar_lea.hbm %s2, %s519
          %s522 = sshll.u32 %s515, 4
          %s523 = int_to_ptr.vmem [resolvable:$true] %s522
          %525 = dma.hbm_to_vmem [thread:$0]  %s520, 16, %s523, %s513
        $region36: #{tpu_custom_call.1} parent=27 // pred_fallthru
          _
        // Predicated region
        $region37: #{tpu_custom_call.1} parent=27 // pred_check
          %p526 = pneg %p135
        $region38: #{tpu_custom_call.1} parent=27 // pred_check_branch
          %528 = sbr.rel (%p526) target = $region40
        $region39: #{tpu_custom_call.1} parent=27 // pred_region
          %s529 = sand.u32 %s42, 1
          %s530 = scalar_lea.sflag [#allocation9], %s529
          %s531 = sand.u32 %s125, 1
          %s532 = smul.addr %s531, 16
          %s533 = scalar_lea.vmem [#allocation8], %s532
          %s535 = ssub.s32 256, 256
          %536 = vsyncadd %s530, %s535
          %s537 = smul.addr %s42, 4
          %s538 = smul.addr %s537, 64
          %s539 = scalar_lea.hbm %s3, %s538
          %s540 = sshll.u32 %s533, 4
          %s541 = int_to_ptr.vmem [resolvable:$true] %s540
          %546 = dma.hbm_to_vmem [thread:$0]  %s539, 256, %s541, %s530, 64, 64, 4
        $region40: #{tpu_custom_call.1} parent=27 // pred_fallthru
          _
        // Predicated region
        $region41: #{tpu_custom_call.1} parent=27 // pred_check
          %p547 = pneg %p161
        $region42: #{tpu_custom_call.1} parent=27 // pred_check_branch
          %549 = sbr.rel (%p547) target = $region44
        $region43: #{tpu_custom_call.1} parent=27 // pred_region
          %s550 = sand.u32 %s42, 1
          %s551 = scalar_lea.sflag [#allocation9], %s550
          %s552 = sand.u32 %s151, 1
          %s553 = scalar_lea.vmem [#allocation10], %s552
          %s555 = ssub.s32 16, 16
          %556 = vsyncadd %s551, %s555
          %s557 = smul.addr %s42, 16
          %s558 = scalar_lea.hbm %s4, %s557
          %s560 = sshll.u32 %s553, 4
          %s561 = int_to_ptr.vmem [resolvable:$true] %s560
          %563 = dma.hbm_to_vmem [thread:$0]  %s558, 16, %s561, %s551
        $region44: #{tpu_custom_call.1} parent=27 // pred_fallthru
          _
        // Predicated region
        $region45: #{tpu_custom_call.1} parent=27 // pred_check
          %p564 = pneg %p187
        $region46: #{tpu_custom_call.1} parent=27 // pred_check_branch
          %566 = sbr.rel (%p564) target = $region48
        $region47: #{tpu_custom_call.1} parent=27 // pred_region
          %s567 = sand.u32 %s42, 1
          %s568 = scalar_lea.sflag [#allocation12], %s567
          %s569 = sand.u32 %s177, 1
          %s570 = smul.addr %s569, 16
          %s571 = scalar_lea.vmem [#allocation11], %s570
          %s573 = ssub.s32 256, 256
          %574 = vsyncadd %s568, %s573
          %s575 = smul.addr %s42, 4
          %s576 = smul.addr %s575, 64
          %s577 = scalar_lea.hbm %s5, %s576
          %s578 = sshll.u32 %s571, 4
          %s579 = int_to_ptr.vmem [resolvable:$true] %s578
          %584 = dma.hbm_to_vmem [thread:$0]  %s577, 256, %s579, %s568, 64, 64, 4
        $region48: #{tpu_custom_call.1} parent=27 // pred_fallthru
          _
        // Predicated region
        $region49: #{tpu_custom_call.1} parent=27 // pred_check
          %p585 = pneg %p213
        $region50: #{tpu_custom_call.1} parent=27 // pred_check_branch
          %587 = sbr.rel (%p585) target = $region52
        $region51: #{tpu_custom_call.1} parent=27 // pred_region
          %s588 = sand.u32 %s42, 1
          %s589 = scalar_lea.sflag [#allocation12], %s588
          %s590 = sand.u32 %s203, 1
          %s591 = scalar_lea.vmem [#allocation13], %s590
          %s593 = ssub.s32 16, 16
          %594 = vsyncadd %s589, %s593
          %s595 = smul.addr %s42, 16
          %s596 = scalar_lea.hbm %s6, %s595
          %s598 = sshll.u32 %s591, 4
          %s599 = int_to_ptr.vmem [resolvable:$true] %s598
          %601 = dma.hbm_to_vmem [thread:$0]  %s596, 16, %s599, %s589
        $region52: #{tpu_custom_call.1} parent=27 // pred_fallthru
          _
        // Predicated region
        $region53: #{tpu_custom_call.1} parent=27 // pred_check
          %p602 = pneg %p239
        $region54: #{tpu_custom_call.1} parent=27 // pred_check_branch
          %604 = sbr.rel (%p602) target = $region56
        $region55: #{tpu_custom_call.1} parent=27 // pred_region
          %s605 = sand.u32 %s42, 1
          %s606 = scalar_lea.sflag [#allocation15], %s605
          %s607 = sand.u32 %s229, 1
          %s608 = scalar_lea.vmem [#allocation14], %s607
          %s610 = ssub.s32 16, 16
          %611 = vsyncadd %s606, %s610
          %s612 = smul.addr %s42, 16
          %s613 = scalar_lea.hbm %s7, %s612
          %s615 = sshll.u32 %s608, 4
          %s616 = int_to_ptr.vmem [resolvable:$true] %s615
          %618 = dma.hbm_to_vmem [thread:$0]  %s613, 16, %s616, %s606
        $region56: #{tpu_custom_call.1} parent=27 // pred_fallthru
          _
        // Predicated region
        $region57: #{tpu_custom_call.1} parent=27 // pred_check
          %p619 = pneg %p265
        $region58: #{tpu_custom_call.1} parent=27 // pred_check_branch
          %621 = sbr.rel (%p619) target = $region60
        $region59: #{tpu_custom_call.1} parent=27 // pred_region
          %s622 = sand.u32 %s42, 1
          %s623 = scalar_lea.sflag [#allocation15], %s622
          %s624 = sand.u32 %s255, 1
          %s625 = scalar_lea.vmem [#allocation16], %s624
          %s627 = ssub.s32 16, 16
          %628 = vsyncadd %s623, %s627
          %s629 = smul.addr %s42, 16
          %s630 = scalar_lea.hbm %s8, %s629
          %s632 = sshll.u32 %s625, 4
          %s633 = int_to_ptr.vmem [resolvable:$true] %s632
          %635 = dma.hbm_to_vmem [thread:$0]  %s630, 16, %s633, %s623
        $region60: #{tpu_custom_call.1} parent=27 // pred_fallthru
          _
        // Predicated region
        $region61: #{tpu_custom_call.1} parent=27 // pred_check
          %p636 = pneg %p291
        $region62: #{tpu_custom_call.1} parent=27 // pred_check_branch
          %638 = sbr.rel (%p636) target = $region64
        $region63: #{tpu_custom_call.1} parent=27 // pred_region
          %s639 = sand.u32 %s42, 1
          %s640 = scalar_lea.sflag [#allocation18], %s639
          %s641 = sand.u32 %s281, 1
          %s642 = smul.addr %s641, 16
          %s643 = scalar_lea.vmem [#allocation17], %s642
          %s645 = ssub.s32 256, 256
          %646 = vsyncadd %s640, %s645
          %s647 = smul.addr %s42, 4
          %s648 = smul.addr %s647, 64
          %s649 = scalar_lea.hbm %s9, %s648
          %s650 = sshll.u32 %s643, 4
          %s651 = int_to_ptr.vmem [resolvable:$true] %s650
          %656 = dma.hbm_to_vmem [thread:$0]  %s649, 256, %s651, %s640, 64, 64, 4
        $region64: #{tpu_custom_call.1} parent=27 // pred_fallthru
          _
        // Predicated region
        $region65: #{tpu_custom_call.1} parent=27 // pred_check
          %p657 = pneg %p317
        $region66: #{tpu_custom_call.1} parent=27 // pred_check_branch
          %659 = sbr.rel (%p657) target = $region68
        $region67: #{tpu_custom_call.1} parent=27 // pred_region
          %s660 = sand.u32 %s42, 1
          %s661 = scalar_lea.sflag [#allocation18], %s660
          %s662 = sand.u32 %s307, 1
          %s663 = scalar_lea.vmem [#allocation19], %s662
          %s665 = ssub.s32 16, 16
          %666 = vsyncadd %s661, %s665
          %s667 = smul.addr %s42, 16
          %s668 = scalar_lea.hbm %s10, %s667
          %s670 = sshll.u32 %s663, 4
          %s671 = int_to_ptr.vmem [resolvable:$true] %s670
          %673 = dma.hbm_to_vmem [thread:$0]  %s668, 16, %s671, %s661
        $region68: #{tpu_custom_call.1} parent=27 // pred_fallthru
          _
        // Predicated region
        $region69: #{tpu_custom_call.1} parent=27 // pred_check
          %p674 = pneg %p343
        $region70: #{tpu_custom_call.1} parent=27 // pred_check_branch
          %676 = sbr.rel (%p674) target = $region72
        $region71: #{tpu_custom_call.1} parent=27 // pred_region
          %s677 = sand.u32 %s42, 1
          %s678 = scalar_lea.sflag [#allocation21], %s677
          %s679 = sand.u32 %s333, 1
          %s680 = smul.addr %s679, 32
          %s681 = scalar_lea.vmem [#allocation20], %s680
          %s683 = ssub.s32 512, 512
          %684 = vsyncadd %s678, %s683
          %s685 = smul.addr %s42, 8
          %s686 = smul.addr %s685, 64
          %s687 = scalar_lea.hbm %s11, %s686
          %s688 = sshll.u32 %s681, 4
          %s689 = int_to_ptr.vmem [resolvable:$true] %s688
          %694 = dma.hbm_to_vmem [thread:$0]  %s687, 512, %s689, %s678, 64, 64, 4
        $region72: #{tpu_custom_call.1} parent=27 // pred_fallthru
          _
        // Predicated region
        $region73: #{tpu_custom_call.1} parent=27 // pred_check
          %p695 = pneg %p369
        $region74: #{tpu_custom_call.1} parent=27 // pred_check_branch
          %697 = sbr.rel (%p695) target = $region76
        $region75: #{tpu_custom_call.1} parent=27 // pred_region
          %s698 = sand.u32 %s42, 1
          %s699 = scalar_lea.sflag [#allocation21], %s698
          %s700 = sand.u32 %s359, 1
          %s701 = scalar_lea.vmem [#allocation22], %s700
          %s703 = ssub.s32 16, 16
          %704 = vsyncadd %s699, %s703
          %s705 = smul.addr %s42, 16
          %s706 = scalar_lea.hbm %s12, %s705
          %s708 = sshll.u32 %s701, 4
          %s709 = int_to_ptr.vmem [resolvable:$true] %s708
          %711 = dma.hbm_to_vmem [thread:$0]  %s706, 16, %s709, %s699
        $region76: #{tpu_custom_call.1} parent=27 // pred_fallthru
          _
      $region28: #{tpu_custom_call.1} parent=5 // pred_fallthru
        _
      %p712 = scmp.le.s32.totalorder 1, %s42
      %p713 = scmp.lt.s32.totalorder %s42, 5
      %p714 = pnand %p712, %p713
      %p715 = pneg %p714
      // Predicated region
      $region77: #{tpu_custom_call.1} parent=5 // pred_check
        _
      $region78: #{tpu_custom_call.1} parent=5 // pred_check_branch
        %717 = sbr.rel (%p714) target = $region80
      $region79: #{tpu_custom_call.1} parent=5 // pred_region
        %s718 = ssub.s32 %s42, 1
        // Predicated region
        $region81: #{tpu_custom_call.1} parent=79 // pred_check
          %p719 = pneg %p63
        $region82: #{tpu_custom_call.1} parent=79 // pred_check_branch
          %721 = sbr.rel (%p719) target = $region84
        $region83: #{tpu_custom_call.1} parent=79 // pred_region
          %722 = dma.done [#allocation3], 256
        $region84: #{tpu_custom_call.1} parent=79 // pred_fallthru
          _
        %s723 = sand.u32 %s47, 1
        %s724 = scalar_lea.sflag [#allocation6], %s723
        %s725 = sand.u32 %s76, 1
        %s726 = scalar_lea.vmem [#allocation5], %s725
        // Predicated region
        $region85: #{tpu_custom_call.1} parent=79 // pred_check
          %p727 = pneg %p89
        $region86: #{tpu_custom_call.1} parent=79 // pred_check_branch
          %729 = sbr.rel (%p727) target = $region88
        $region87: #{tpu_custom_call.1} parent=79 // pred_region
          %730 = dma.done %s724, 16
        $region88: #{tpu_custom_call.1} parent=79 // pred_fallthru
          _
        %s731 = sand.u32 %s47, 1
        %s732 = scalar_lea.sflag [#allocation6], %s731
        %s733 = sand.u32 %s102, 1
        %s734 = scalar_lea.vmem [#allocation7], %s733
        // Predicated region
        $region89: #{tpu_custom_call.1} parent=79 // pred_check
          %p735 = pneg %p115
        $region90: #{tpu_custom_call.1} parent=79 // pred_check_branch
          %737 = sbr.rel (%p735) target = $region92
        $region91: #{tpu_custom_call.1} parent=79 // pred_region
          %738 = dma.done %s732, 16
        $region92: #{tpu_custom_call.1} parent=79 // pred_fallthru
          _
        %s739 = sand.u32 %s47, 1
        %s740 = scalar_lea.sflag [#allocation9], %s739
        %s741 = sand.u32 %s128, 1
        %s742 = smul.addr %s741, 16
        %s743 = scalar_lea.vmem [#allocation8], %s742
        // Predicated region
        $region93: #{tpu_custom_call.1} parent=79 // pred_check
          %p744 = pneg %p141
        $region94: #{tpu_custom_call.1} parent=79 // pred_check_branch
          %746 = sbr.rel (%p744) target = $region96
        $region95: #{tpu_custom_call.1} parent=79 // pred_region
          %747 = dma.done %s740, 256
        $region96: #{tpu_custom_call.1} parent=79 // pred_fallthru
          _
        %s748 = sand.u32 %s47, 1
        %s749 = scalar_lea.sflag [#allocation9], %s748
        %s750 = sand.u32 %s154, 1
        %s751 = scalar_lea.vmem [#allocation10], %s750
        // Predicated region
        $region97: #{tpu_custom_call.1} parent=79 // pred_check
          %p752 = pneg %p167
        $region98: #{tpu_custom_call.1} parent=79 // pred_check_branch
          %754 = sbr.rel (%p752) target = $region100
        $region99: #{tpu_custom_call.1} parent=79 // pred_region
          %755 = dma.done %s749, 16
        $region100: #{tpu_custom_call.1} parent=79 // pred_fallthru
          _
        %s756 = sand.u32 %s47, 1
        %s757 = scalar_lea.sflag [#allocation12], %s756
        %s758 = sand.u32 %s180, 1
        %s759 = smul.addr %s758, 16
        %s760 = scalar_lea.vmem [#allocation11], %s759
        // Predicated region
        $region101: #{tpu_custom_call.1} parent=79 // pred_check
          %p761 = pneg %p193
        $region102: #{tpu_custom_call.1} parent=79 // pred_check_branch
          %763 = sbr.rel (%p761) target = $region104
        $region103: #{tpu_custom_call.1} parent=79 // pred_region
          %764 = dma.done %s757, 256
        $region104: #{tpu_custom_call.1} parent=79 // pred_fallthru
          _
        %s765 = sand.u32 %s47, 1
        %s766 = scalar_lea.sflag [#allocation12], %s765
        %s767 = sand.u32 %s206, 1
        %s768 = scalar_lea.vmem [#allocation13], %s767
        // Predicated region
        $region105: #{tpu_custom_call.1} parent=79 // pred_check
          %p769 = pneg %p219
        $region106: #{tpu_custom_call.1} parent=79 // pred_check_branch
          %771 = sbr.rel (%p769) target = $region108
        $region107: #{tpu_custom_call.1} parent=79 // pred_region
          %772 = dma.done %s766, 16
        $region108: #{tpu_custom_call.1} parent=79 // pred_fallthru
          _
        %s773 = sand.u32 %s47, 1
        %s774 = scalar_lea.sflag [#allocation15], %s773
        %s775 = sand.u32 %s232, 1
        %s776 = scalar_lea.vmem [#allocation14], %s775
        // Predicated region
        $region109: #{tpu_custom_call.1} parent=79 // pred_check
          %p777 = pneg %p245
        $region110: #{tpu_custom_call.1} parent=79 // pred_check_branch
          %779 = sbr.rel (%p777) target = $region112
        $region111: #{tpu_custom_call.1} parent=79 // pred_region
          %780 = dma.done %s774, 16
        $region112: #{tpu_custom_call.1} parent=79 // pred_fallthru
          _
        %s781 = sand.u32 %s47, 1
        %s782 = scalar_lea.sflag [#allocation15], %s781
        %s783 = sand.u32 %s258, 1
        %s784 = scalar_lea.vmem [#allocation16], %s783
        // Predicated region
        $region113: #{tpu_custom_call.1} parent=79 // pred_check
          %p785 = pneg %p271
        $region114: #{tpu_custom_call.1} parent=79 // pred_check_branch
          %787 = sbr.rel (%p785) target = $region116
        $region115: #{tpu_custom_call.1} parent=79 // pred_region
          %788 = dma.done %s782, 16
        $region116: #{tpu_custom_call.1} parent=79 // pred_fallthru
          _
        %s789 = sand.u32 %s47, 1
        %s790 = scalar_lea.sflag [#allocation18], %s789
        %s791 = sand.u32 %s284, 1
        %s792 = smul.addr %s791, 16
        %s793 = scalar_lea.vmem [#allocation17], %s792
        // Predicated region
        $region117: #{tpu_custom_call.1} parent=79 // pred_check
          %p794 = pneg %p297
        $region118: #{tpu_custom_call.1} parent=79 // pred_check_branch
          %796 = sbr.rel (%p794) target = $region120
        $region119: #{tpu_custom_call.1} parent=79 // pred_region
          %797 = dma.done %s790, 256
        $region120: #{tpu_custom_call.1} parent=79 // pred_fallthru
          _
        %s798 = sand.u32 %s47, 1
        %s799 = scalar_lea.sflag [#allocation18], %s798
        %s800 = sand.u32 %s310, 1
        %s801 = scalar_lea.vmem [#allocation19], %s800
        // Predicated region
        $region121: #{tpu_custom_call.1} parent=79 // pred_check
          %p802 = pneg %p323
        $region122: #{tpu_custom_call.1} parent=79 // pred_check_branch
          %804 = sbr.rel (%p802) target = $region124
        $region123: #{tpu_custom_call.1} parent=79 // pred_region
          %805 = dma.done %s799, 16
        $region124: #{tpu_custom_call.1} parent=79 // pred_fallthru
          _
        %s806 = sand.u32 %s47, 1
        %s807 = scalar_lea.sflag [#allocation21], %s806
        %s808 = sand.u32 %s336, 1
        %s809 = smul.addr %s808, 32
        %s810 = scalar_lea.vmem [#allocation20], %s809
        // Predicated region
        $region125: #{tpu_custom_call.1} parent=79 // pred_check
          %p811 = pneg %p349
        $region126: #{tpu_custom_call.1} parent=79 // pred_check_branch
          %813 = sbr.rel (%p811) target = $region128
        $region127: #{tpu_custom_call.1} parent=79 // pred_region
          %814 = dma.done %s807, 512
        $region128: #{tpu_custom_call.1} parent=79 // pred_fallthru
          _
        %s815 = sand.u32 %s47, 1
        %s816 = scalar_lea.sflag [#allocation21], %s815
        %s817 = sand.u32 %s362, 1
        %s818 = scalar_lea.vmem [#allocation22], %s817
        // Predicated region
        $region129: #{tpu_custom_call.1} parent=79 // pred_check
          %p819 = pneg %p375
        $region130: #{tpu_custom_call.1} parent=79 // pred_check_branch
          %821 = sbr.rel (%p819) target = $region132
        $region131: #{tpu_custom_call.1} parent=79 // pred_region
          %822 = dma.done %s816, 16
        $region132: #{tpu_custom_call.1} parent=79 // pred_fallthru
          _
        // Predicated region
        $region133: #{tpu_custom_call.1} parent=79 // pred_check
          %p823 = pneg %p396
        $region134: #{tpu_custom_call.1} parent=79 // pred_check_branch
          %825 = sbr.rel (%p823) target = $region136
        $region135: #{tpu_custom_call.1} parent=79 // pred_region
          %826 = dma.done [#allocation24], 16
        $region136: #{tpu_custom_call.1} parent=79 // pred_fallthru
          _
        // Predicated region
        $region137: #{tpu_custom_call.1} parent=79 // pred_check
          %p827 = pneg %p417
        $region138: #{tpu_custom_call.1} parent=79 // pred_check_branch
          %829 = sbr.rel (%p827) target = $region140
        $region139: #{tpu_custom_call.1} parent=79 // pred_region
          %830 = dma.done [#allocation24], 16
        $region140: #{tpu_custom_call.1} parent=79 // pred_fallthru
          _
        %p831 = pneg %p63
        %p832 = pneg %p60
        %s833 = sand.u32 %s47, 1
        %s834 = scalar_lea.sflag [#allocation6], %s833
        %s835 = sand.u32 %s76, 1
        %s836 = scalar_lea.vmem [#allocation5], %s835
        %p837 = pneg %p89
        %p838 = pneg %p86
        %s839 = sand.u32 %s47, 1
        %s840 = scalar_lea.sflag [#allocation6], %s839
        %s841 = sand.u32 %s102, 1
        %s842 = scalar_lea.vmem [#allocation7], %s841
        %p843 = pneg %p115
        %p844 = pneg %p112
        %s845 = sand.u32 %s47, 1
        %s846 = scalar_lea.sflag [#allocation9], %s845
        %s847 = sand.u32 %s128, 1
        %s848 = smul.addr %s847, 16
        %s849 = scalar_lea.vmem [#allocation8], %s848
        %p850 = pneg %p141
        %p851 = pneg %p138
        %s852 = sand.u32 %s47, 1
        %s853 = scalar_lea.sflag [#allocation9], %s852
        %s854 = sand.u32 %s154, 1
        %s855 = scalar_lea.vmem [#allocation10], %s854
        %p856 = pneg %p167
        %p857 = pneg %p164
        %s858 = sand.u32 %s47, 1
        %s859 = scalar_lea.sflag [#allocation12], %s858
        %s860 = sand.u32 %s180, 1
        %s861 = smul.addr %s860, 16
        %s862 = scalar_lea.vmem [#allocation11], %s861
        %p863 = pneg %p193
        %p864 = pneg %p190
        %s865 = sand.u32 %s47, 1
        %s866 = scalar_lea.sflag [#allocation12], %s865
        %s867 = sand.u32 %s206, 1
        %s868 = scalar_lea.vmem [#allocation13], %s867
        %p869 = pneg %p219
        %p870 = pneg %p216
        %s871 = sand.u32 %s47, 1
        %s872 = scalar_lea.sflag [#allocation15], %s871
        %s873 = sand.u32 %s232, 1
        %s874 = scalar_lea.vmem [#allocation14], %s873
        %p875 = pneg %p245
        %p876 = pneg %p242
        %s877 = sand.u32 %s47, 1
        %s878 = scalar_lea.sflag [#allocation15], %s877
        %s879 = sand.u32 %s258, 1
        %s880 = scalar_lea.vmem [#allocation16], %s879
        %p881 = pneg %p271
        %p882 = pneg %p268
        %s883 = sand.u32 %s47, 1
        %s884 = scalar_lea.sflag [#allocation18], %s883
        %s885 = sand.u32 %s284, 1
        %s886 = smul.addr %s885, 16
        %s887 = scalar_lea.vmem [#allocation17], %s886
        %p888 = pneg %p297
        %p889 = pneg %p294
        %s890 = sand.u32 %s47, 1
        %s891 = scalar_lea.sflag [#allocation18], %s890
        %s892 = sand.u32 %s310, 1
        %s893 = scalar_lea.vmem [#allocation19], %s892
        %p894 = pneg %p323
        %p895 = pneg %p320
        %s896 = sand.u32 %s47, 1
        %s897 = scalar_lea.sflag [#allocation21], %s896
        %s898 = sand.u32 %s336, 1
        %s899 = smul.addr %s898, 32
        %s900 = scalar_lea.vmem [#allocation20], %s899
        %p901 = pneg %p349
        %p902 = pneg %p346
        %s903 = sand.u32 %s47, 1
        %s904 = scalar_lea.sflag [#allocation21], %s903
        %s905 = sand.u32 %s362, 1
        %s906 = scalar_lea.vmem [#allocation22], %s905
        %p907 = pneg %p375
        %p908 = pneg %p372
        %p909 = pneg %p396
        %p910 = pneg %p393
        %p911 = pneg %p417
        %p912 = pneg %p414
        %p913 = pneg %p438
        %p914 = pneg %p435
        %p916 = scmp.eq.s32.totalorder %s47, 0
        // Predicated region
        $region141: #{tpu_custom_call.1} parent=79 // pred_check
          %p917 = pneg %p916
        $region142: #{tpu_custom_call.1} parent=79 // pred_check_branch
          %919 = sbr.rel (%p917) target = $region144
        $region143: #{tpu_custom_call.1} parent=79 // pred_region
          %v920 = vld [vmem:[#allocation2] sm:$0xff]
          %v921 = vld [vmem:[#allocation2 + $0x8] sm:$0xff]
          %vm922 = vcmask 261120
          %923 = vst.msk [vmem:[#allocation26] sm:$0xff] %vm922, %v920
          %924 = vst.msk [vmem:[#allocation26 + $0x8] sm:$0xff] %vm922, %v921
        $region144: #{tpu_custom_call.1} parent=79 // pred_fallthru
          _
        %v925 = vld [vmem:[#allocation26] sm:$0xff]
        %v926 = vld [vmem:[#allocation26 + $0x8] sm:$0xff]
        %v927 = vld [vmem:[%s726] sm:$0x1]
        %v928 = vld [vmem:[%s734] sm:$0x1]
        %vm929 = vcmask 261120
        %v930 = vsel %vm929, %v925, 0.0
        %931 = vadd.xlane.f32.xlu0 %v930
        %v932 = vpop.xlane.xlu0 %931
        %v933 = vsel %vm929, %v926, 0.0
        %934 = vadd.xlane.f32.xlu0 %v933
        %v935 = vpop.xlane.xlu0 %934
        %v936 = vrcp.pop 32.0
        %v937 = vmul.f32 %v932, %v936
        %v938 = vmul.f32 %v935, %v936
        %v939 = vsub.f32 %v925, %v937
        %v940 = vsub.f32 %v926, %v938
        %v941 = vmul.f32 %v939, %v939
        %v942 = vmul.f32 %v940, %v940
        %v943 = vsel %vm929, %v941, 0.0
        %944 = vadd.xlane.f32.xlu0 %v943
        %v945 = vpop.xlane.xlu0 %944
        %v946 = vsel %vm929, %v942, 0.0
        %947 = vadd.xlane.f32.xlu0 %v946
        %v948 = vpop.xlane.xlu0 %947
        %v949 = vmul.f32 %v945, %v936
        %v950 = vmul.f32 %v948, %v936
        %v951 = vadd.f32 %v949, 1e-05
        %v952 = vadd.f32 %v950, 1e-05
        %v953 = vrsqrt.pop %v951
        %v954 = vrsqrt.pop %v952
        %v955 = vmul.f32 %v939, %v953
        %v956 = vmul.f32 %v940, %v954
        %v958 = vlaneseq
        %v959 = vshrl.u32 %v958, 7
        %v960 = vsub.s32 0, %v959
        %v961 = vrot.slane %v927, %v960
        %v963 = vmul.f32 %v961, %v955
        %v964 = vmul.f32 %v961, %v956
        %v966 = vlaneseq
        %v967 = vshrl.u32 %v966, 7
        %v968 = vsub.s32 0, %v967
        %v969 = vrot.slane %v928, %v968
        %v971 = vadd.f32 %v963, %v969
        %v972 = vadd.f32 %v964, %v969
        %v973 = vpack.c.bf16 %v972, %v971
        %v974 = vld [vmem:[%s743] sm:$0xf]
        %v975 = vld [vmem:[%s743 + $0x4] sm:$0xf]
        %v976 = vld [vmem:[%s743 + $0x8] sm:$0xf]
        %v977 = vld [vmem:[%s743 + $0xc] sm:$0xf]
        %v978 = vld [vmem:[%s751] sm:$0x1]
        %v980 = vlaneseq
        %v981 = vshrl.u32 %v980, 7
        %v982 = vsub.s32 0, %v981
        %v983 = vrot.slane %v978, %v982
        %v989 = vunpack.c.l.b16 %v974
        %v990 = vunpack.c.l.b16 %v975
        %v991 = vunpack.c.l.b16 %v976
        %v992 = vunpack.c.l.b16 %v977
        %v993 = vpack.c.b16 %v990, %v989
        %v994 = vpack.c.b16 %v992, %v991
        %v998 = vsel %vm929, %v973, 0
        %1000 = vmatprep.subr.bf16.mxu0 0
        %1001 = vmatpush1.bf16.msra.mxu0 %v993
        %1002 = vmatprep.subr.bf16.mxu0 0
        %1003 = vmatpush1.bf16.msra.mxu0 %v994
        %1004 = vmatprep.subr.bf16.mxu0 0
        %1005 = vmatpush1.bf16.msra.mxu0 0
        %1006 = vmatprep.subr.bf16.mxu0 0
        %1007 = vmatpush1.bf16.msra.mxu0 0
        %1008 = vmatprep.subr.bf16.mxu0 0
        %1009 = vmatpush1.bf16.msra.mxu0 0
        %1010 = vmatprep.subr.bf16.mxu0 0
        %1011 = vmatpush1.bf16.msra.mxu0 0
        %1012 = vmatprep.subr.bf16.mxu0 0
        %1013 = vmatpush1.bf16.msra.mxu0 0
        %1014 = vmatprep.subr.bf16.mxu0 0
        %1015 = vmatpush1.bf16.msra.mxu0 0
        %1016 = vmatprep.subr.bf16.mxu0 0
        %1017 = vmatpush1.bf16.msra.mxu0 0
        %1018 = vmatprep.subr.bf16.mxu0 0
        %1019 = vmatpush1.bf16.msra.mxu0 0
        %1020 = vmatprep.subr.bf16.mxu0 0
        %1021 = vmatpush1.bf16.msra.mxu0 0
        %1022 = vmatprep.subr.bf16.mxu0 0
        %1023 = vmatpush1.bf16.msra.mxu0 0
        %1024 = vmatprep.subr.bf16.mxu0 0
        %1025 = vmatpush1.bf16.msra.mxu0 0
        %1026 = vmatprep.subr.bf16.mxu0 0
        %1027 = vmatpush1.bf16.msra.mxu0 0
        %1028 = vmatprep.subr.bf16.mxu0 0
        %1029 = vmatpush1.bf16.msra.mxu0 0
        %1030 = vmatprep.subr.bf16.mxu0 0
        %1031 = vmatpush1.bf16.msra.mxu0 0
        %1032 = vmatprep.mubr.bf16.mxu0 0
        %1033 = vmatmul.mubr.bf16.gmra.mrb[0].mxu0 %v998
        %v1034 = vpop.f32.mrb[0].mxu0
        %v1035 = vadd.f32 %v983, %v1034
        %v1036 = vpop.f32.mrb[0].mxu0
        %v1037 = vpop.f32.mrb[0].mxu0
        %v1038 = vadd.f32 %v983, %v1037
        %v1039 = vpop.f32.mrb[0].mxu0
        %1040 = vdwg.mxu0
        %v1041 = vmul.f32 %v1035, 0.35355338
        %v1042 = vmul.f32 %v1038, 0.35355338
        %v1043 = vpack.c.bf16 %v1041, %v1041
        %v1044 = vpack.c.bf16 %v1042, %v1042
        %v1045 = vpack.c.bf16 %v1035, %v1035
        %v1046 = vpack.c.bf16 %v1038, %v1038
        %1048 = vrot.lane.b32.xlu0 %v1045, 96
        %v1049 = vpop.permute.xlu0 %1048
        %vm1050 = vcmask 64512
        %v1052 = vsel %vm1050, %v1043, 0
        %v1055 = vsel %vm1050, %v1049, 0
        %1057 = vmatprep.subr.bf16.mxu0 0
        %1058 = vmatpush1.bf16.xpose.msra.mxu0 %v1055
        %1059 = vmatprep.subr.bf16.mxu0 0
        %1060 = vmatpush1.bf16.xpose.msra.mxu0 0
        %1061 = vmatprep.subr.bf16.mxu0 0
        %1062 = vmatpush1.bf16.xpose.msra.mxu0 0
        %1063 = vmatprep.subr.bf16.mxu0 0
        %1064 = vmatpush1.bf16.xpose.msra.mxu0 0
        %1065 = vmatprep.subr.bf16.mxu0 0
        %1066 = vmatpush1.bf16.xpose.msra.mxu0 0
        %1067 = vmatprep.subr.bf16.mxu0 0
        %1068 = vmatpush1.bf16.xpose.msra.mxu0 0
        %1069 = vmatprep.subr.bf16.mxu0 0
        %1070 = vmatpush1.bf16.xpose.msra.mxu0 0
        %1071 = vmatprep.subr.bf16.mxu0 0
        %1072 = vmatpush1.bf16.xpose.msra.mxu0 0
        %1073 = vmatprep.subr.bf16.mxu0 0
        %1074 = vmatpush1.bf16.xpose.msra.mxu0 0
        %1075 = vmatprep.subr.bf16.mxu0 0
        %1076 = vmatpush1.bf16.xpose.msra.mxu0 0
        %1077 = vmatprep.subr.bf16.mxu0 0
        %1078 = vmatpush1.bf16.xpose.msra.mxu0 0
        %1079 = vmatprep.subr.bf16.mxu0 0
        %1080 = vmatpush1.bf16.xpose.msra.mxu0 0
        %1081 = vmatprep.subr.bf16.mxu0 0
        %1082 = vmatpush1.bf16.xpose.msra.mxu0 0
        %1083 = vmatprep.subr.bf16.mxu0 0
        %1084 = vmatpush1.bf16.xpose.msra.mxu0 0
        %1085 = vmatprep.subr.bf16.mxu0 0
        %1086 = vmatpush1.bf16.xpose.msra.mxu0 0
        %1087 = vmatprep.subr.bf16.mxu0 0
        %1088 = vmatpush1.bf16.xpose.msra.mxu0 0
        %1089 = vmatprep.mubr.bf16.mxu0 0
        %1090 = vmatmul.mubr.bf16.gmra.mrb[0].mxu0 %v1052
        %v1091 = vpop.f32.mrb[0].mxu0
        %v1092 = vadd.f32 0.0, %v1091
        %v1093 = vpop.f32.mrb[0].mxu0
        %v1094 = vpop.f32.mrb[0].mxu0
        %v1095 = vpop.f32.mrb[0].mxu0
        %1096 = vdwg.mxu0
        %1098 = vrot.lane.b32.xlu0 %v1046, 96
        %v1099 = vpop.permute.xlu0 %1098
        %v1101 = vsel %vm1050, %v1044, 0
        %v1104 = vsel %vm1050, %v1099, 0
        %1106 = vmatprep.subr.bf16.mxu0 0
        %1107 = vmatpush1.bf16.xpose.msra.mxu0 %v1104
        %1108 = vmatprep.subr.bf16.mxu0 0
        %1109 = vmatpush1.bf16.xpose.msra.mxu0 0
        %1110 = vmatprep.subr.bf16.mxu0 0
        %1111 = vmatpush1.bf16.xpose.msra.mxu0 0
        %1112 = vmatprep.subr.bf16.mxu0 0
        %1113 = vmatpush1.bf16.xpose.msra.mxu0 0
        %1114 = vmatprep.subr.bf16.mxu0 0
        %1115 = vmatpush1.bf16.xpose.msra.mxu0 0
        %1116 = vmatprep.subr.bf16.mxu0 0
        %1117 = vmatpush1.bf16.xpose.msra.mxu0 0
        %1118 = vmatprep.subr.bf16.mxu0 0
        %1119 = vmatpush1.bf16.xpose.msra.mxu0 0
        %1120 = vmatprep.subr.bf16.mxu0 0
        %1121 = vmatpush1.bf16.xpose.msra.mxu0 0
        %1122 = vmatprep.subr.bf16.mxu0 0
        %1123 = vmatpush1.bf16.xpose.msra.mxu0 0
        %1124 = vmatprep.subr.bf16.mxu0 0
        %1125 = vmatpush1.bf16.xpose.msra.mxu0 0
        %1126 = vmatprep.subr.bf16.mxu0 0
        %1127 = vmatpush1.bf16.xpose.msra.mxu0 0
        %1128 = vmatprep.subr.bf16.mxu0 0
        %1129 = vmatpush1.bf16.xpose.msra.mxu0 0
        %1130 = vmatprep.subr.bf16.mxu0 0
        %1131 = vmatpush1.bf16.xpose.msra.mxu0 0
        %1132 = vmatprep.subr.bf16.mxu0 0
        %1133 = vmatpush1.bf16.xpose.msra.mxu0 0
        %1134 = vmatprep.subr.bf16.mxu0 0
        %1135 = vmatpush1.bf16.xpose.msra.mxu0 0
        %1136 = vmatprep.subr.bf16.mxu0 0
        %1137 = vmatpush1.bf16.xpose.msra.mxu0 0
        %1138 = vmatprep.mubr.bf16.mxu0 0
        %1139 = vmatmul.mubr.bf16.gmra.mrb[0].mxu0 %v1101
        %v1140 = vpop.f32.mrb[0].mxu0
        %v1141 = vadd.f32 0.0, %v1140
        %v1142 = vpop.f32.mrb[0].mxu0
        %v1143 = vpop.f32.mrb[0].mxu0
        %v1144 = vpop.f32.mrb[0].mxu0
        %1145 = vdwg.mxu0
        %v1146 = vsel %vm1050, %v1092, -inf
        %1147 = vmax.xlane.f32.xlu0 %v1146
        %v1148 = vpop.xlane.xlu0 %1147
        %v1149 = vsel %vm1050, %v1141, -inf
        %1150 = vmax.xlane.f32.xlu0 %v1149
        %v1151 = vpop.xlane.xlu0 %1150
        %v1152 = vsub.f32 %v1092, %v1148
        %v1153 = vsub.f32 %v1141, %v1151
        %v1154 = vmul.f32 %v1152, 1.442695
        %v1155 = vpow.pop %v1154
        %v1156 = vmul.f32 %v1153, 1.442695
        %v1157 = vpow.pop %v1156
        %v1158 = vsel %vm1050, %v1155, 0.0
        %1159 = vadd.xlane.f32.xlu0 %v1158
        %v1160 = vpop.xlane.xlu0 %1159
        %v1161 = vsel %vm1050, %v1157, 0.0
        %1162 = vadd.xlane.f32.xlu0 %v1161
        %v1163 = vpop.xlane.xlu0 %1162
        %v1164 = vrcp.pop %v1160
        %v1165 = vrcp.pop %v1163
        %v1166 = vmul.f32 %v1155, %v1164
        %v1167 = vmul.f32 %v1157, %v1165
        %v1168 = vpack.c.bf16 %v1166, %v1166
        %v1169 = vpack.c.bf16 %v1167, %v1167
        %1170 = vrot.lane.b32.xlu0 %v1045, 64
        %v1171 = vpop.permute.xlu0 %1170
        %v1173 = vsel %vm1050, %v1168, 0
        %vm1175 = vcmask 1043456
        %v1177 = vsel %vm1175, %v1171, 0
        %1179 = vmatprep.subr.bf16.mxu0 0
        %1180 = vmatpush1.bf16.msra.mxu0 %v1177
        %1181 = vmatprep.subr.bf16.mxu0 0
        %1182 = vmatpush1.bf16.msra.mxu0 0
        %1183 = vmatprep.subr.bf16.mxu0 0
        %1184 = vmatpush1.bf16.msra.mxu0 0
        %1185 = vmatprep.subr.bf16.mxu0 0
        %1186 = vmatpush1.bf16.msra.mxu0 0
        %1187 = vmatprep.subr.bf16.mxu0 0
        %1188 = vmatpush1.bf16.msra.mxu0 0
        %1189 = vmatprep.subr.bf16.mxu0 0
        %1190 = vmatpush1.bf16.msra.mxu0 0
        %1191 = vmatprep.subr.bf16.mxu0 0
        %1192 = vmatpush1.bf16.msra.mxu0 0
        %1193 = vmatprep.subr.bf16.mxu0 0
        %1194 = vmatpush1.bf16.msra.mxu0 0
        %1195 = vmatprep.subr.bf16.mxu0 0
        %1196 = vmatpush1.bf16.msra.mxu0 0
        %1197 = vmatprep.subr.bf16.mxu0 0
        %1198 = vmatpush1.bf16.msra.mxu0 0
        %1199 = vmatprep.subr.bf16.mxu0 0
        %1200 = vmatpush1.bf16.msra.mxu0 0
        %1201 = vmatprep.subr.bf16.mxu0 0
        %1202 = vmatpush1.bf16.msra.mxu0 0
        %1203 = vmatprep.subr.bf16.mxu0 0
        %1204 = vmatpush1.bf16.msra.mxu0 0
        %1205 = vmatprep.subr.bf16.mxu0 0
        %1206 = vmatpush1.bf16.msra.mxu0 0
        %1207 = vmatprep.subr.bf16.mxu0 0
        %1208 = vmatpush1.bf16.msra.mxu0 0
        %1209 = vmatprep.subr.bf16.mxu0 0
        %1210 = vmatpush1.bf16.msra.mxu0 0
        %1211 = vmatprep.mubr.bf16.mxu0 0
        %1212 = vmatmul.mubr.bf16.gmra.mrb[0].mxu0 %v1173
        %v1213 = vpop.f32.mrb[0].mxu0
        %v1214 = vadd.f32 0.0, %v1213
        %v1215 = vpop.f32.mrb[0].mxu0
        %v1216 = vpop.f32.mrb[0].mxu0
        %v1217 = vpop.f32.mrb[0].mxu0
        %1218 = vdwg.mxu0
        %1219 = vrot.lane.b32.xlu0 %v1046, 64
        %v1220 = vpop.permute.xlu0 %1219
        %v1222 = vsel %vm1050, %v1169, 0
        %v1225 = vsel %vm1175, %v1220, 0
        %1227 = vmatprep.subr.bf16.mxu0 0
        %1228 = vmatpush1.bf16.msra.mxu0 %v1225
        %1229 = vmatprep.subr.bf16.mxu0 0
        %1230 = vmatpush1.bf16.msra.mxu0 0
        %1231 = vmatprep.subr.bf16.mxu0 0
        %1232 = vmatpush1.bf16.msra.mxu0 0
        %1233 = vmatprep.subr.bf16.mxu0 0
        %1234 = vmatpush1.bf16.msra.mxu0 0
        %1235 = vmatprep.subr.bf16.mxu0 0
        %1236 = vmatpush1.bf16.msra.mxu0 0
        %1237 = vmatprep.subr.bf16.mxu0 0
        %1238 = vmatpush1.bf16.msra.mxu0 0
        %1239 = vmatprep.subr.bf16.mxu0 0
        %1240 = vmatpush1.bf16.msra.mxu0 0
        %1241 = vmatprep.subr.bf16.mxu0 0
        %1242 = vmatpush1.bf16.msra.mxu0 0
        %1243 = vmatprep.subr.bf16.mxu0 0
        %1244 = vmatpush1.bf16.msra.mxu0 0
        %1245 = vmatprep.subr.bf16.mxu0 0
        %1246 = vmatpush1.bf16.msra.mxu0 0
        %1247 = vmatprep.subr.bf16.mxu0 0
        %1248 = vmatpush1.bf16.msra.mxu0 0
        %1249 = vmatprep.subr.bf16.mxu0 0
        %1250 = vmatpush1.bf16.msra.mxu0 0
        %1251 = vmatprep.subr.bf16.mxu0 0
        %1252 = vmatpush1.bf16.msra.mxu0 0
        %1253 = vmatprep.subr.bf16.mxu0 0
        %1254 = vmatpush1.bf16.msra.mxu0 0
        %1255 = vmatprep.subr.bf16.mxu0 0
        %1256 = vmatpush1.bf16.msra.mxu0 0
        %1257 = vmatprep.subr.bf16.mxu0 0
        %1258 = vmatpush1.bf16.msra.mxu0 0
        %1259 = vmatprep.mubr.bf16.mxu0 0
        %1260 = vmatmul.mubr.bf16.gmra.mrb[0].mxu0 %v1222
        %v1261 = vpop.f32.mrb[0].mxu0
        %v1262 = vadd.f32 0.0, %v1261
        %v1263 = vpop.f32.mrb[0].mxu0
        %v1264 = vpop.f32.mrb[0].mxu0
        %v1265 = vpop.f32.mrb[0].mxu0
        %1266 = vdwg.mxu0
        %1268 = vrot.lane.b32.xlu0 %v1043, 120
        %v1269 = vpop.permute.xlu0 %1268
        %1270 = vrot.lane.b32.xlu0 %v1045, 88
        %v1271 = vpop.permute.xlu0 %1270
        %v1273 = vsel %vm1050, %v1269, 0
        %v1276 = vsel %vm1050, %v1271, 0
        %1278 = vmatprep.subr.bf16.mxu0 0
        %1279 = vmatpush1.bf16.xpose.msra.mxu0 %v1276
        %1280 = vmatprep.subr.bf16.mxu0 0
        %1281 = vmatpush1.bf16.xpose.msra.mxu0 0
        %1282 = vmatprep.subr.bf16.mxu0 0
        %1283 = vmatpush1.bf16.xpose.msra.mxu0 0
        %1284 = vmatprep.subr.bf16.mxu0 0
        %1285 = vmatpush1.bf16.xpose.msra.mxu0 0
        %1286 = vmatprep.subr.bf16.mxu0 0
        %1287 = vmatpush1.bf16.xpose.msra.mxu0 0
        %1288 = vmatprep.subr.bf16.mxu0 0
        %1289 = vmatpush1.bf16.xpose.msra.mxu0 0
        %1290 = vmatprep.subr.bf16.mxu0 0
        %1291 = vmatpush1.bf16.xpose.msra.mxu0 0
        %1292 = vmatprep.subr.bf16.mxu0 0
        %1293 = vmatpush1.bf16.xpose.msra.mxu0 0
        %1294 = vmatprep.subr.bf16.mxu0 0
        %1295 = vmatpush1.bf16.xpose.msra.mxu0 0
        %1296 = vmatprep.subr.bf16.mxu0 0
        %1297 = vmatpush1.bf16.xpose.msra.mxu0 0
        %1298 = vmatprep.subr.bf16.mxu0 0
        %1299 = vmatpush1.bf16.xpose.msra.mxu0 0
        %1300 = vmatprep.subr.bf16.mxu0 0
        %1301 = vmatpush1.bf16.xpose.msra.mxu0 0
        %1302 = vmatprep.subr.bf16.mxu0 0
        %1303 = vmatpush1.bf16.xpose.msra.mxu0 0
        %1304 = vmatprep.subr.bf16.mxu0 0
        %1305 = vmatpush1.bf16.xpose.msra.mxu0 0
        %1306 = vmatprep.subr.bf16.mxu0 0
        %1307 = vmatpush1.bf16.xpose.msra.mxu0 0
        %1308 = vmatprep.subr.bf16.mxu0 0
        %1309 = vmatpush1.bf16.xpose.msra.mxu0 0
        %1310 = vmatprep.mubr.bf16.mxu0 0
        %1311 = vmatmul.mubr.bf16.gmra.mrb[0].mxu0 %v1273
        %v1312 = vpop.f32.mrb[0].mxu0
        %v1313 = vadd.f32 0.0, %v1312
        %v1314 = vpop.f32.mrb[0].mxu0
        %v1315 = vpop.f32.mrb[0].mxu0
        %v1316 = vpop.f32.mrb[0].mxu0
        %1317 = vdwg.mxu0
        %1319 = vrot.lane.b32.xlu0 %v1044, 120
        %v1320 = vpop.permute.xlu0 %1319
        %1321 = vrot.lane.b32.xlu0 %v1046, 88
        %v1322 = vpop.permute.xlu0 %1321
        %v1324 = vsel %vm1050, %v1320, 0
        %v1327 = vsel %vm1050, %v1322, 0
        %1329 = vmatprep.subr.bf16.mxu0 0
        %1330 = vmatpush1.bf16.xpose.msra.mxu0 %v1327
        %1331 = vmatprep.subr.bf16.mxu0 0
        %1332 = vmatpush1.bf16.xpose.msra.mxu0 0
        %1333 = vmatprep.subr.bf16.mxu0 0
        %1334 = vmatpush1.bf16.xpose.msra.mxu0 0
        %1335 = vmatprep.subr.bf16.mxu0 0
        %1336 = vmatpush1.bf16.xpose.msra.mxu0 0
        %1337 = vmatprep.subr.bf16.mxu0 0
        %1338 = vmatpush1.bf16.xpose.msra.mxu0 0
        %1339 = vmatprep.subr.bf16.mxu0 0
        %1340 = vmatpush1.bf16.xpose.msra.mxu0 0
        %1341 = vmatprep.subr.bf16.mxu0 0
        %1342 = vmatpush1.bf16.xpose.msra.mxu0 0
        %1343 = vmatprep.subr.bf16.mxu0 0
        %1344 = vmatpush1.bf16.xpose.msra.mxu0 0
        %1345 = vmatprep.subr.bf16.mxu0 0
        %1346 = vmatpush1.bf16.xpose.msra.mxu0 0
        %1347 = vmatprep.subr.bf16.mxu0 0
        %1348 = vmatpush1.bf16.xpose.msra.mxu0 0
        %1349 = vmatprep.subr.bf16.mxu0 0
        %1350 = vmatpush1.bf16.xpose.msra.mxu0 0
        %1351 = vmatprep.subr.bf16.mxu0 0
        %1352 = vmatpush1.bf16.xpose.msra.mxu0 0
        %1353 = vmatprep.subr.bf16.mxu0 0
        %1354 = vmatpush1.bf16.xpose.msra.mxu0 0
        %1355 = vmatprep.subr.bf16.mxu0 0
        %1356 = vmatpush1.bf16.xpose.msra.mxu0 0
        %1357 = vmatprep.subr.bf16.mxu0 0
        %1358 = vmatpush1.bf16.xpose.msra.mxu0 0
        %1359 = vmatprep.subr.bf16.mxu0 0
        %1360 = vmatpush1.bf16.xpose.msra.mxu0 0
        %1361 = vmatprep.mubr.bf16.mxu0 0
        %1362 = vmatmul.mubr.bf16.gmra.mrb[0].mxu0 %v1324
        %v1363 = vpop.f32.mrb[0].mxu0
        %v1364 = vadd.f32 0.0, %v1363
        %v1365 = vpop.f32.mrb[0].mxu0
        %v1366 = vpop.f32.mrb[0].mxu0
        %v1367 = vpop.f32.mrb[0].mxu0
        %1368 = vdwg.mxu0
        %v1369 = vsel %vm1050, %v1313, -inf
        %1370 = vmax.xlane.f32.xlu0 %v1369
        %v1371 = vpop.xlane.xlu0 %1370
        %v1372 = vsel %vm1050, %v1364, -inf
        %1373 = vmax.xlane.f32.xlu0 %v1372
        %v1374 = vpop.xlane.xlu0 %1373
        %v1375 = vsub.f32 %v1313, %v1371
        %v1376 = vsub.f32 %v1364, %v1374
        %v1377 = vmul.f32 %v1375, 1.442695
        %v1378 = vpow.pop %v1377
        %v1379 = vmul.f32 %v1376, 1.442695
        %v1380 = vpow.pop %v1379
        %v1381 = vsel %vm1050, %v1378, 0.0
        %1382 = vadd.xlane.f32.xlu0 %v1381
        %v1383 = vpop.xlane.xlu0 %1382
        %v1384 = vsel %vm1050, %v1380, 0.0
        %1385 = vadd.xlane.f32.xlu0 %v1384
        %v1386 = vpop.xlane.xlu0 %1385
        %v1387 = vrcp.pop %v1383
        %v1388 = vrcp.pop %v1386
        %v1389 = vmul.f32 %v1378, %v1387
        %v1390 = vmul.f32 %v1380, %v1388
        %v1391 = vpack.c.bf16 %v1389, %v1389
        %v1392 = vpack.c.bf16 %v1390, %v1390
        %1393 = vrot.lane.b32.xlu0 %v1045, 56
        %v1394 = vpop.permute.xlu0 %1393
        %v1396 = vsel %vm1050, %v1391, 0
        %v1399 = vsel %vm1175, %v1394, 0
        %1401 = vmatprep.subr.bf16.mxu0 0
        %1402 = vmatpush1.bf16.msra.mxu0 %v1399
        %1403 = vmatprep.subr.bf16.mxu0 0
        %1404 = vmatpush1.bf16.msra.mxu0 0
        %1405 = vmatprep.subr.bf16.mxu0 0
        %1406 = vmatpush1.bf16.msra.mxu0 0
        %1407 = vmatprep.subr.bf16.mxu0 0
        %1408 = vmatpush1.bf16.msra.mxu0 0
        %1409 = vmatprep.subr.bf16.mxu0 0
        %1410 = vmatpush1.bf16.msra.mxu0 0
        %1411 = vmatprep.subr.bf16.mxu0 0
        %1412 = vmatpush1.bf16.msra.mxu0 0
        %1413 = vmatprep.subr.bf16.mxu0 0
        %1414 = vmatpush1.bf16.msra.mxu0 0
        %1415 = vmatprep.subr.bf16.mxu0 0
        %1416 = vmatpush1.bf16.msra.mxu0 0
        %1417 = vmatprep.subr.bf16.mxu0 0
        %1418 = vmatpush1.bf16.msra.mxu0 0
        %1419 = vmatprep.subr.bf16.mxu0 0
        %1420 = vmatpush1.bf16.msra.mxu0 0
        %1421 = vmatprep.subr.bf16.mxu0 0
        %1422 = vmatpush1.bf16.msra.mxu0 0
        %1423 = vmatprep.subr.bf16.mxu0 0
        %1424 = vmatpush1.bf16.msra.mxu0 0
        %1425 = vmatprep.subr.bf16.mxu0 0
        %1426 = vmatpush1.bf16.msra.mxu0 0
        %1427 = vmatprep.subr.bf16.mxu0 0
        %1428 = vmatpush1.bf16.msra.mxu0 0
        %1429 = vmatprep.subr.bf16.mxu0 0
        %1430 = vmatpush1.bf16.msra.mxu0 0
        %1431 = vmatprep.subr.bf16.mxu0 0
        %1432 = vmatpush1.bf16.msra.mxu0 0
        %1433 = vmatprep.mubr.bf16.mxu0 0
        %1434 = vmatmul.mubr.bf16.gmra.mrb[0].mxu0 %v1396
        %v1435 = vpop.f32.mrb[0].mxu0
        %v1436 = vadd.f32 0.0, %v1435
        %v1437 = vpop.f32.mrb[0].mxu0
        %v1438 = vpop.f32.mrb[0].mxu0
        %v1439 = vpop.f32.mrb[0].mxu0
        %1440 = vdwg.mxu0
        %1441 = vrot.lane.b32.xlu0 %v1046, 56
        %v1442 = vpop.permute.xlu0 %1441
        %v1444 = vsel %vm1050, %v1392, 0
        %v1447 = vsel %vm1175, %v1442, 0
        %1449 = vmatprep.subr.bf16.mxu0 0
        %1450 = vmatpush1.bf16.msra.mxu0 %v1447
        %1451 = vmatprep.subr.bf16.mxu0 0
        %1452 = vmatpush1.bf16.msra.mxu0 0
        %1453 = vmatprep.subr.bf16.mxu0 0
        %1454 = vmatpush1.bf16.msra.mxu0 0
        %1455 = vmatprep.subr.bf16.mxu0 0
        %1456 = vmatpush1.bf16.msra.mxu0 0
        %1457 = vmatprep.subr.bf16.mxu0 0
        %1458 = vmatpush1.bf16.msra.mxu0 0
        %1459 = vmatprep.subr.bf16.mxu0 0
        %1460 = vmatpush1.bf16.msra.mxu0 0
        %1461 = vmatprep.subr.bf16.mxu0 0
        %1462 = vmatpush1.bf16.msra.mxu0 0
        %1463 = vmatprep.subr.bf16.mxu0 0
        %1464 = vmatpush1.bf16.msra.mxu0 0
        %1465 = vmatprep.subr.bf16.mxu0 0
        %1466 = vmatpush1.bf16.msra.mxu0 0
        %1467 = vmatprep.subr.bf16.mxu0 0
        %1468 = vmatpush1.bf16.msra.mxu0 0
        %1469 = vmatprep.subr.bf16.mxu0 0
        %1470 = vmatpush1.bf16.msra.mxu0 0
        %1471 = vmatprep.subr.bf16.mxu0 0
        %1472 = vmatpush1.bf16.msra.mxu0 0
        %1473 = vmatprep.subr.bf16.mxu0 0
        %1474 = vmatpush1.bf16.msra.mxu0 0
        %1475 = vmatprep.subr.bf16.mxu0 0
        %1476 = vmatpush1.bf16.msra.mxu0 0
        %1477 = vmatprep.subr.bf16.mxu0 0
        %1478 = vmatpush1.bf16.msra.mxu0 0
        %1479 = vmatprep.subr.bf16.mxu0 0
        %1480 = vmatpush1.bf16.msra.mxu0 0
        %1481 = vmatprep.mubr.bf16.mxu0 0
        %1482 = vmatmul.mubr.bf16.gmra.mrb[0].mxu0 %v1444
        %v1483 = vpop.f32.mrb[0].mxu0
        %v1484 = vadd.f32 0.0, %v1483
        %v1485 = vpop.f32.mrb[0].mxu0
        %v1486 = vpop.f32.mrb[0].mxu0
        %v1487 = vpop.f32.mrb[0].mxu0
        %1488 = vdwg.mxu0
        %1489 = vrot.lane.b32.xlu0 %v1043, 112
        %v1490 = vpop.permute.xlu0 %1489
        %1491 = vrot.lane.b32.xlu0 %v1045, 80
        %v1492 = vpop.permute.xlu0 %1491
        %v1494 = vsel %vm1050, %v1490, 0
        %v1497 = vsel %vm1050, %v1492, 0
        %1499 = vmatprep.subr.bf16.mxu0 0
        %1500 = vmatpush1.bf16.xpose.msra.mxu0 %v1497
        %1501 = vmatprep.subr.bf16.mxu0 0
        %1502 = vmatpush1.bf16.xpose.msra.mxu0 0
        %1503 = vmatprep.subr.bf16.mxu0 0
        %1504 = vmatpush1.bf16.xpose.msra.mxu0 0
        %1505 = vmatprep.subr.bf16.mxu0 0
        %1506 = vmatpush1.bf16.xpose.msra.mxu0 0
        %1507 = vmatprep.subr.bf16.mxu0 0
        %1508 = vmatpush1.bf16.xpose.msra.mxu0 0
        %1509 = vmatprep.subr.bf16.mxu0 0
        %1510 = vmatpush1.bf16.xpose.msra.mxu0 0
        %1511 = vmatprep.subr.bf16.mxu0 0
        %1512 = vmatpush1.bf16.xpose.msra.mxu0 0
        %1513 = vmatprep.subr.bf16.mxu0 0
        %1514 = vmatpush1.bf16.xpose.msra.mxu0 0
        %1515 = vmatprep.subr.bf16.mxu0 0
        %1516 = vmatpush1.bf16.xpose.msra.mxu0 0
        %1517 = vmatprep.subr.bf16.mxu0 0
        %1518 = vmatpush1.bf16.xpose.msra.mxu0 0
        %1519 = vmatprep.subr.bf16.mxu0 0
        %1520 = vmatpush1.bf16.xpose.msra.mxu0 0
        %1521 = vmatprep.subr.bf16.mxu0 0
        %1522 = vmatpush1.bf16.xpose.msra.mxu0 0
        %1523 = vmatprep.subr.bf16.mxu0 0
        %1524 = vmatpush1.bf16.xpose.msra.mxu0 0
        %1525 = vmatprep.subr.bf16.mxu0 0
        %1526 = vmatpush1.bf16.xpose.msra.mxu0 0
        %1527 = vmatprep.subr.bf16.mxu0 0
        %1528 = vmatpush1.bf16.xpose.msra.mxu0 0
        %1529 = vmatprep.subr.bf16.mxu0 0
        %1530 = vmatpush1.bf16.xpose.msra.mxu0 0
        %1531 = vmatprep.mubr.bf16.mxu0 0
        %1532 = vmatmul.mubr.bf16.gmra.mrb[0].mxu0 %v1494
        %v1533 = vpop.f32.mrb[0].mxu0
        %v1534 = vadd.f32 0.0, %v1533
        %v1535 = vpop.f32.mrb[0].mxu0
        %v1536 = vpop.f32.mrb[0].mxu0
        %v1537 = vpop.f32.mrb[0].mxu0
        %1538 = vdwg.mxu0
        %1539 = vrot.lane.b32.xlu0 %v1044, 112
        %v1540 = vpop.permute.xlu0 %1539
        %1541 = vrot.lane.b32.xlu0 %v1046, 80
        %v1542 = vpop.permute.xlu0 %1541
        %v1544 = vsel %vm1050, %v1540, 0
        %v1547 = vsel %vm1050, %v1542, 0
        %1549 = vmatprep.subr.bf16.mxu0 0
        %1550 = vmatpush1.bf16.xpose.msra.mxu0 %v1547
        %1551 = vmatprep.subr.bf16.mxu0 0
        %1552 = vmatpush1.bf16.xpose.msra.mxu0 0
        %1553 = vmatprep.subr.bf16.mxu0 0
        %1554 = vmatpush1.bf16.xpose.msra.mxu0 0
        %1555 = vmatprep.subr.bf16.mxu0 0
        %1556 = vmatpush1.bf16.xpose.msra.mxu0 0
        %1557 = vmatprep.subr.bf16.mxu0 0
        %1558 = vmatpush1.bf16.xpose.msra.mxu0 0
        %1559 = vmatprep.subr.bf16.mxu0 0
        %1560 = vmatpush1.bf16.xpose.msra.mxu0 0
        %1561 = vmatprep.subr.bf16.mxu0 0
        %1562 = vmatpush1.bf16.xpose.msra.mxu0 0
        %1563 = vmatprep.subr.bf16.mxu0 0
        %1564 = vmatpush1.bf16.xpose.msra.mxu0 0
        %1565 = vmatprep.subr.bf16.mxu0 0
        %1566 = vmatpush1.bf16.xpose.msra.mxu0 0
        %1567 = vmatprep.subr.bf16.mxu0 0
        %1568 = vmatpush1.bf16.xpose.msra.mxu0 0
        %1569 = vmatprep.subr.bf16.mxu0 0
        %1570 = vmatpush1.bf16.xpose.msra.mxu0 0
        %1571 = vmatprep.subr.bf16.mxu0 0
        %1572 = vmatpush1.bf16.xpose.msra.mxu0 0
        %1573 = vmatprep.subr.bf16.mxu0 0
        %1574 = vmatpush1.bf16.xpose.msra.mxu0 0
        %1575 = vmatprep.subr.bf16.mxu0 0
        %1576 = vmatpush1.bf16.xpose.msra.mxu0 0
        %1577 = vmatprep.subr.bf16.mxu0 0
        %1578 = vmatpush1.bf16.xpose.msra.mxu0 0
        %1579 = vmatprep.subr.bf16.mxu0 0
        %1580 = vmatpush1.bf16.xpose.msra.mxu0 0
        %1581 = vmatprep.mubr.bf16.mxu0 0
        %1582 = vmatmul.mubr.bf16.gmra.mrb[0].mxu0 %v1544
        %v1583 = vpop.f32.mrb[0].mxu0
        %v1584 = vadd.f32 0.0, %v1583
        %v1585 = vpop.f32.mrb[0].mxu0
        %v1586 = vpop.f32.mrb[0].mxu0
        %v1587 = vpop.f32.mrb[0].mxu0
        %1588 = vdwg.mxu0
        %v1589 = vsel %vm1050, %v1534, -inf
        %1590 = vmax.xlane.f32.xlu0 %v1589
        %v1591 = vpop.xlane.xlu0 %1590
        %v1592 = vsel %vm1050, %v1584, -inf
        %1593 = vmax.xlane.f32.xlu0 %v1592
        %v1594 = vpop.xlane.xlu0 %1593
        %v1595 = vsub.f32 %v1534, %v1591
        %v1596 = vsub.f32 %v1584, %v1594
        %v1597 = vmul.f32 %v1595, 1.442695
        %v1598 = vpow.pop %v1597
        %v1599 = vmul.f32 %v1596, 1.442695
        %v1600 = vpow.pop %v1599
        %v1601 = vsel %vm1050, %v1598, 0.0
        %1602 = vadd.xlane.f32.xlu0 %v1601
        %v1603 = vpop.xlane.xlu0 %1602
        %v1604 = vsel %vm1050, %v1600, 0.0
        %1605 = vadd.xlane.f32.xlu0 %v1604
        %v1606 = vpop.xlane.xlu0 %1605
        %v1607 = vrcp.pop %v1603
        %v1608 = vrcp.pop %v1606
        %v1609 = vmul.f32 %v1598, %v1607
        %v1610 = vmul.f32 %v1600, %v1608
        %v1611 = vpack.c.bf16 %v1609, %v1609
        %v1612 = vpack.c.bf16 %v1610, %v1610
        %1613 = vrot.lane.b32.xlu0 %v1045, 48
        %v1614 = vpop.permute.xlu0 %1613
        %v1616 = vsel %vm1050, %v1611, 0
        %v1619 = vsel %vm1175, %v1614, 0
        %1621 = vmatprep.subr.bf16.mxu0 0
        %1622 = vmatpush1.bf16.msra.mxu0 %v1619
        %1623 = vmatprep.subr.bf16.mxu0 0
        %1624 = vmatpush1.bf16.msra.mxu0 0
        %1625 = vmatprep.subr.bf16.mxu0 0
        %1626 = vmatpush1.bf16.msra.mxu0 0
        %1627 = vmatprep.subr.bf16.mxu0 0
        %1628 = vmatpush1.bf16.msra.mxu0 0
        %1629 = vmatprep.subr.bf16.mxu0 0
        %1630 = vmatpush1.bf16.msra.mxu0 0
        %1631 = vmatprep.subr.bf16.mxu0 0
        %1632 = vmatpush1.bf16.msra.mxu0 0
        %1633 = vmatprep.subr.bf16.mxu0 0
        %1634 = vmatpush1.bf16.msra.mxu0 0
        %1635 = vmatprep.subr.bf16.mxu0 0
        %1636 = vmatpush1.bf16.msra.mxu0 0
        %1637 = vmatprep.subr.bf16.mxu0 0
        %1638 = vmatpush1.bf16.msra.mxu0 0
        %1639 = vmatprep.subr.bf16.mxu0 0
        %1640 = vmatpush1.bf16.msra.mxu0 0
        %1641 = vmatprep.subr.bf16.mxu0 0
        %1642 = vmatpush1.bf16.msra.mxu0 0
        %1643 = vmatprep.subr.bf16.mxu0 0
        %1644 = vmatpush1.bf16.msra.mxu0 0
        %1645 = vmatprep.subr.bf16.mxu0 0
        %1646 = vmatpush1.bf16.msra.mxu0 0
        %1647 = vmatprep.subr.bf16.mxu0 0
        %1648 = vmatpush1.bf16.msra.mxu0 0
        %1649 = vmatprep.subr.bf16.mxu0 0
        %1650 = vmatpush1.bf16.msra.mxu0 0
        %1651 = vmatprep.subr.bf16.mxu0 0
        %1652 = vmatpush1.bf16.msra.mxu0 0
        %1653 = vmatprep.mubr.bf16.mxu0 0
        %1654 = vmatmul.mubr.bf16.gmra.mrb[0].mxu0 %v1616
        %v1655 = vpop.f32.mrb[0].mxu0
        %v1656 = vadd.f32 0.0, %v1655
        %v1657 = vpop.f32.mrb[0].mxu0
        %v1658 = vpop.f32.mrb[0].mxu0
        %v1659 = vpop.f32.mrb[0].mxu0
        %1660 = vdwg.mxu0
        %1661 = vrot.lane.b32.xlu0 %v1046, 48
        %v1662 = vpop.permute.xlu0 %1661
        %v1664 = vsel %vm1050, %v1612, 0
        %v1667 = vsel %vm1175, %v1662, 0
        %1669 = vmatprep.subr.bf16.mxu0 0
        %1670 = vmatpush1.bf16.msra.mxu0 %v1667
        %1671 = vmatprep.subr.bf16.mxu0 0
        %1672 = vmatpush1.bf16.msra.mxu0 0
        %1673 = vmatprep.subr.bf16.mxu0 0
        %1674 = vmatpush1.bf16.msra.mxu0 0
        %1675 = vmatprep.subr.bf16.mxu0 0
        %1676 = vmatpush1.bf16.msra.mxu0 0
        %1677 = vmatprep.subr.bf16.mxu0 0
        %1678 = vmatpush1.bf16.msra.mxu0 0
        %1679 = vmatprep.subr.bf16.mxu0 0
        %1680 = vmatpush1.bf16.msra.mxu0 0
        %1681 = vmatprep.subr.bf16.mxu0 0
        %1682 = vmatpush1.bf16.msra.mxu0 0
        %1683 = vmatprep.subr.bf16.mxu0 0
        %1684 = vmatpush1.bf16.msra.mxu0 0
        %1685 = vmatprep.subr.bf16.mxu0 0
        %1686 = vmatpush1.bf16.msra.mxu0 0
        %1687 = vmatprep.subr.bf16.mxu0 0
        %1688 = vmatpush1.bf16.msra.mxu0 0
        %1689 = vmatprep.subr.bf16.mxu0 0
        %1690 = vmatpush1.bf16.msra.mxu0 0
        %1691 = vmatprep.subr.bf16.mxu0 0
        %1692 = vmatpush1.bf16.msra.mxu0 0
        %1693 = vmatprep.subr.bf16.mxu0 0
        %1694 = vmatpush1.bf16.msra.mxu0 0
        %1695 = vmatprep.subr.bf16.mxu0 0
        %1696 = vmatpush1.bf16.msra.mxu0 0
        %1697 = vmatprep.subr.bf16.mxu0 0
        %1698 = vmatpush1.bf16.msra.mxu0 0
        %1699 = vmatprep.subr.bf16.mxu0 0
        %1700 = vmatpush1.bf16.msra.mxu0 0
        %1701 = vmatprep.mubr.bf16.mxu0 0
        %1702 = vmatmul.mubr.bf16.gmra.mrb[0].mxu0 %v1664
        %v1703 = vpop.f32.mrb[0].mxu0
        %v1704 = vadd.f32 0.0, %v1703
        %v1705 = vpop.f32.mrb[0].mxu0
        %v1706 = vpop.f32.mrb[0].mxu0
        %v1707 = vpop.f32.mrb[0].mxu0
        %1708 = vdwg.mxu0
        %1709 = vrot.lane.b32.xlu0 %v1043, 104
        %v1710 = vpop.permute.xlu0 %1709
        %1711 = vrot.lane.b32.xlu0 %v1045, 72
        %v1712 = vpop.permute.xlu0 %1711
        %v1714 = vsel %vm1050, %v1710, 0
        %v1717 = vsel %vm1050, %v1712, 0
        %1719 = vmatprep.subr.bf16.mxu0 0
        %1720 = vmatpush1.bf16.xpose.msra.mxu0 %v1717
        %1721 = vmatprep.subr.bf16.mxu0 0
        %1722 = vmatpush1.bf16.xpose.msra.mxu0 0
        %1723 = vmatprep.subr.bf16.mxu0 0
        %1724 = vmatpush1.bf16.xpose.msra.mxu0 0
        %1725 = vmatprep.subr.bf16.mxu0 0
        %1726 = vmatpush1.bf16.xpose.msra.mxu0 0
        %1727 = vmatprep.subr.bf16.mxu0 0
        %1728 = vmatpush1.bf16.xpose.msra.mxu0 0
        %1729 = vmatprep.subr.bf16.mxu0 0
        %1730 = vmatpush1.bf16.xpose.msra.mxu0 0
        %1731 = vmatprep.subr.bf16.mxu0 0
        %1732 = vmatpush1.bf16.xpose.msra.mxu0 0
        %1733 = vmatprep.subr.bf16.mxu0 0
        %1734 = vmatpush1.bf16.xpose.msra.mxu0 0
        %1735 = vmatprep.subr.bf16.mxu0 0
        %1736 = vmatpush1.bf16.xpose.msra.mxu0 0
        %1737 = vmatprep.subr.bf16.mxu0 0
        %1738 = vmatpush1.bf16.xpose.msra.mxu0 0
        %1739 = vmatprep.subr.bf16.mxu0 0
        %1740 = vmatpush1.bf16.xpose.msra.mxu0 0
        %1741 = vmatprep.subr.bf16.mxu0 0
        %1742 = vmatpush1.bf16.xpose.msra.mxu0 0
        %1743 = vmatprep.subr.bf16.mxu0 0
        %1744 = vmatpush1.bf16.xpose.msra.mxu0 0
        %1745 = vmatprep.subr.bf16.mxu0 0
        %1746 = vmatpush1.bf16.xpose.msra.mxu0 0
        %1747 = vmatprep.subr.bf16.mxu0 0
        %1748 = vmatpush1.bf16.xpose.msra.mxu0 0
        %1749 = vmatprep.subr.bf16.mxu0 0
        %1750 = vmatpush1.bf16.xpose.msra.mxu0 0
        %1751 = vmatprep.mubr.bf16.mxu0 0
        %1752 = vmatmul.mubr.bf16.gmra.mrb[0].mxu0 %v1714
        %v1753 = vpop.f32.mrb[0].mxu0
        %v1754 = vadd.f32 0.0, %v1753
        %v1755 = vpop.f32.mrb[0].mxu0
        %v1756 = vpop.f32.mrb[0].mxu0
        %v1757 = vpop.f32.mrb[0].mxu0
        %1758 = vdwg.mxu0
        %1759 = vrot.lane.b32.xlu0 %v1044, 104
        %v1760 = vpop.permute.xlu0 %1759
        %1761 = vrot.lane.b32.xlu0 %v1046, 72
        %v1762 = vpop.permute.xlu0 %1761
        %v1764 = vsel %vm1050, %v1760, 0
        %v1767 = vsel %vm1050, %v1762, 0
        %1769 = vmatprep.subr.bf16.mxu0 0
        %1770 = vmatpush1.bf16.xpose.msra.mxu0 %v1767
        %1771 = vmatprep.subr.bf16.mxu0 0
        %1772 = vmatpush1.bf16.xpose.msra.mxu0 0
        %1773 = vmatprep.subr.bf16.mxu0 0
        %1774 = vmatpush1.bf16.xpose.msra.mxu0 0
        %1775 = vmatprep.subr.bf16.mxu0 0
        %1776 = vmatpush1.bf16.xpose.msra.mxu0 0
        %1777 = vmatprep.subr.bf16.mxu0 0
        %1778 = vmatpush1.bf16.xpose.msra.mxu0 0
        %1779 = vmatprep.subr.bf16.mxu0 0
        %1780 = vmatpush1.bf16.xpose.msra.mxu0 0
        %1781 = vmatprep.subr.bf16.mxu0 0
        %1782 = vmatpush1.bf16.xpose.msra.mxu0 0
        %1783 = vmatprep.subr.bf16.mxu0 0
        %1784 = vmatpush1.bf16.xpose.msra.mxu0 0
        %1785 = vmatprep.subr.bf16.mxu0 0
        %1786 = vmatpush1.bf16.xpose.msra.mxu0 0
        %1787 = vmatprep.subr.bf16.mxu0 0
        %1788 = vmatpush1.bf16.xpose.msra.mxu0 0
        %1789 = vmatprep.subr.bf16.mxu0 0
        %1790 = vmatpush1.bf16.xpose.msra.mxu0 0
        %1791 = vmatprep.subr.bf16.mxu0 0
        %1792 = vmatpush1.bf16.xpose.msra.mxu0 0
        %1793 = vmatprep.subr.bf16.mxu0 0
        %1794 = vmatpush1.bf16.xpose.msra.mxu0 0
        %1795 = vmatprep.subr.bf16.mxu0 0
        %1796 = vmatpush1.bf16.xpose.msra.mxu0 0
        %1797 = vmatprep.subr.bf16.mxu0 0
        %1798 = vmatpush1.bf16.xpose.msra.mxu0 0
        %1799 = vmatprep.subr.bf16.mxu0 0
        %1800 = vmatpush1.bf16.xpose.msra.mxu0 0
        %1801 = vmatprep.mubr.bf16.mxu0 0
        %1802 = vmatmul.mubr.bf16.gmra.mrb[0].mxu0 %v1764
        %v1803 = vpop.f32.mrb[0].mxu0
        %v1804 = vadd.f32 0.0, %v1803
        %v1805 = vpop.f32.mrb[0].mxu0
        %v1806 = vpop.f32.mrb[0].mxu0
        %v1807 = vpop.f32.mrb[0].mxu0
        %1808 = vdwg.mxu0
        %v1809 = vsel %vm1050, %v1754, -inf
        %1810 = vmax.xlane.f32.xlu0 %v1809
        %v1811 = vpop.xlane.xlu0 %1810
        %v1812 = vsel %vm1050, %v1804, -inf
        %1813 = vmax.xlane.f32.xlu0 %v1812
        %v1814 = vpop.xlane.xlu0 %1813
        %v1815 = vsub.f32 %v1754, %v1811
        %v1816 = vsub.f32 %v1804, %v1814
        %v1817 = vmul.f32 %v1815, 1.442695
        %v1818 = vpow.pop %v1817
        %v1819 = vmul.f32 %v1816, 1.442695
        %v1820 = vpow.pop %v1819
        %v1821 = vsel %vm1050, %v1818, 0.0
        %1822 = vadd.xlane.f32.xlu0 %v1821
        %v1823 = vpop.xlane.xlu0 %1822
        %v1824 = vsel %vm1050, %v1820, 0.0
        %1825 = vadd.xlane.f32.xlu0 %v1824
        %v1826 = vpop.xlane.xlu0 %1825
        %v1827 = vrcp.pop %v1823
        %v1828 = vrcp.pop %v1826
        %v1829 = vmul.f32 %v1818, %v1827
        %v1830 = vmul.f32 %v1820, %v1828
        %v1831 = vpack.c.bf16 %v1829, %v1829
        %v1832 = vpack.c.bf16 %v1830, %v1830
        %1833 = vrot.lane.b32.xlu0 %v1045, 40
        %v1834 = vpop.permute.xlu0 %1833
        %v1836 = vsel %vm1050, %v1831, 0
        %v1839 = vsel %vm1175, %v1834, 0
        %1841 = vmatprep.subr.bf16.mxu0 0
        %1842 = vmatpush1.bf16.msra.mxu0 %v1839
        %1843 = vmatprep.subr.bf16.mxu0 0
        %1844 = vmatpush1.bf16.msra.mxu0 0
        %1845 = vmatprep.subr.bf16.mxu0 0
        %1846 = vmatpush1.bf16.msra.mxu0 0
        %1847 = vmatprep.subr.bf16.mxu0 0
        %1848 = vmatpush1.bf16.msra.mxu0 0
        %1849 = vmatprep.subr.bf16.mxu0 0
        %1850 = vmatpush1.bf16.msra.mxu0 0
        %1851 = vmatprep.subr.bf16.mxu0 0
        %1852 = vmatpush1.bf16.msra.mxu0 0
        %1853 = vmatprep.subr.bf16.mxu0 0
        %1854 = vmatpush1.bf16.msra.mxu0 0
        %1855 = vmatprep.subr.bf16.mxu0 0
        %1856 = vmatpush1.bf16.msra.mxu0 0
        %1857 = vmatprep.subr.bf16.mxu0 0
        %1858 = vmatpush1.bf16.msra.mxu0 0
        %1859 = vmatprep.subr.bf16.mxu0 0
        %1860 = vmatpush1.bf16.msra.mxu0 0
        %1861 = vmatprep.subr.bf16.mxu0 0
        %1862 = vmatpush1.bf16.msra.mxu0 0
        %1863 = vmatprep.subr.bf16.mxu0 0
        %1864 = vmatpush1.bf16.msra.mxu0 0
        %1865 = vmatprep.subr.bf16.mxu0 0
        %1866 = vmatpush1.bf16.msra.mxu0 0
        %1867 = vmatprep.subr.bf16.mxu0 0
        %1868 = vmatpush1.bf16.msra.mxu0 0
        %1869 = vmatprep.subr.bf16.mxu0 0
        %1870 = vmatpush1.bf16.msra.mxu0 0
        %1871 = vmatprep.subr.bf16.mxu0 0
        %1872 = vmatpush1.bf16.msra.mxu0 0
        %1873 = vmatprep.mubr.bf16.mxu0 0
        %1874 = vmatmul.mubr.bf16.gmra.mrb[0].mxu0 %v1836
        %v1875 = vpop.f32.mrb[0].mxu0
        %v1876 = vadd.f32 0.0, %v1875
        %v1877 = vpop.f32.mrb[0].mxu0
        %v1878 = vpop.f32.mrb[0].mxu0
        %v1879 = vpop.f32.mrb[0].mxu0
        %1880 = vdwg.mxu0
        %1881 = vrot.lane.b32.xlu0 %v1046, 40
        %v1882 = vpop.permute.xlu0 %1881
        %v1884 = vsel %vm1050, %v1832, 0
        %v1887 = vsel %vm1175, %v1882, 0
        %1889 = vmatprep.subr.bf16.mxu0 0
        %1890 = vmatpush1.bf16.msra.mxu0 %v1887
        %1891 = vmatprep.subr.bf16.mxu0 0
        %1892 = vmatpush1.bf16.msra.mxu0 0
        %1893 = vmatprep.subr.bf16.mxu0 0
        %1894 = vmatpush1.bf16.msra.mxu0 0
        %1895 = vmatprep.subr.bf16.mxu0 0
        %1896 = vmatpush1.bf16.msra.mxu0 0
        %1897 = vmatprep.subr.bf16.mxu0 0
        %1898 = vmatpush1.bf16.msra.mxu0 0
        %1899 = vmatprep.subr.bf16.mxu0 0
        %1900 = vmatpush1.bf16.msra.mxu0 0
        %1901 = vmatprep.subr.bf16.mxu0 0
        %1902 = vmatpush1.bf16.msra.mxu0 0
        %1903 = vmatprep.subr.bf16.mxu0 0
        %1904 = vmatpush1.bf16.msra.mxu0 0
        %1905 = vmatprep.subr.bf16.mxu0 0
        %1906 = vmatpush1.bf16.msra.mxu0 0
        %1907 = vmatprep.subr.bf16.mxu0 0
        %1908 = vmatpush1.bf16.msra.mxu0 0
        %1909 = vmatprep.subr.bf16.mxu0 0
        %1910 = vmatpush1.bf16.msra.mxu0 0
        %1911 = vmatprep.subr.bf16.mxu0 0
        %1912 = vmatpush1.bf16.msra.mxu0 0
        %1913 = vmatprep.subr.bf16.mxu0 0
        %1914 = vmatpush1.bf16.msra.mxu0 0
        %1915 = vmatprep.subr.bf16.mxu0 0
        %1916 = vmatpush1.bf16.msra.mxu0 0
        %1917 = vmatprep.subr.bf16.mxu0 0
        %1918 = vmatpush1.bf16.msra.mxu0 0
        %1919 = vmatprep.subr.bf16.mxu0 0
        %1920 = vmatpush1.bf16.msra.mxu0 0
        %1921 = vmatprep.mubr.bf16.mxu0 0
        %1922 = vmatmul.mubr.bf16.gmra.mrb[0].mxu0 %v1884
        %v1923 = vpop.f32.mrb[0].mxu0
        %v1924 = vadd.f32 0.0, %v1923
        %v1925 = vpop.f32.mrb[0].mxu0
        %v1926 = vpop.f32.mrb[0].mxu0
        %v1927 = vpop.f32.mrb[0].mxu0
        %1928 = vdwg.mxu0
        %1931 = vrot.lane.b32.xlu0 %v1436, 8
        %v1932 = vpop.permute.xlu0 %1931
        %1933 = vrot.lane.b32.xlu0 %v1484, 8
        %v1934 = vpop.permute.xlu0 %1933
        %1939 = vrot.lane.b32.xlu0 %v1656, 16
        %v1940 = vpop.permute.xlu0 %1939
        %1941 = vrot.lane.b32.xlu0 %v1704, 16
        %v1942 = vpop.permute.xlu0 %1941
        %1947 = vrot.lane.b32.xlu0 %v1876, 24
        %v1948 = vpop.permute.xlu0 %1947
        %1949 = vrot.lane.b32.xlu0 %v1924, 24
        %v1950 = vpop.permute.xlu0 %1949
        %v1953 = vsel %vm1050, %v1214, %v1932
        %v1954 = vsel %vm1050, %v1262, %v1934
        %vm1955 = vcmask 130048
        %v1956 = vsel %vm1955, %v1953, %v1940
        %v1957 = vsel %vm1955, %v1954, %v1942
        %vm1958 = vcmask 195584
        %v1959 = vsel %vm1958, %v1956, %v1948
        %v1960 = vsel %vm1958, %v1957, %v1950
        %v1961 = vpack.c.bf16 %v1960, %v1959
        %v1962 = vld [vmem:[%s760] sm:$0xf]
        %v1963 = vld [vmem:[%s760 + $0x4] sm:$0xf]
        %v1964 = vld [vmem:[%s760 + $0x8] sm:$0xf]
        %v1965 = vld [vmem:[%s760 + $0xc] sm:$0xf]
        %v1966 = vld [vmem:[%s768] sm:$0x1]
        %v1968 = vlaneseq
        %v1969 = vshrl.u32 %v1968, 7
        %v1970 = vsub.s32 0, %v1969
        %v1971 = vrot.slane %v1966, %v1970
        %v1977 = vunpack.c.l.b16 %v1962
        %v1978 = vunpack.c.l.b16 %v1963
        %v1979 = vunpack.c.l.b16 %v1964
        %v1980 = vunpack.c.l.b16 %v1965
        %v1981 = vpack.c.b16 %v1978, %v1977
        %v1982 = vpack.c.b16 %v1980, %v1979
        %v1986 = vsel %vm929, %v1961, 0
        %1988 = vmatprep.subr.bf16.mxu0 0
        %1989 = vmatpush1.bf16.msra.mxu0 %v1981
        %1990 = vmatprep.subr.bf16.mxu0 0
        %1991 = vmatpush1.bf16.msra.mxu0 %v1982
        %1992 = vmatprep.subr.bf16.mxu0 0
        %1993 = vmatpush1.bf16.msra.mxu0 0
        %1994 = vmatprep.subr.bf16.mxu0 0
        %1995 = vmatpush1.bf16.msra.mxu0 0
        %1996 = vmatprep.subr.bf16.mxu0 0
        %1997 = vmatpush1.bf16.msra.mxu0 0
        %1998 = vmatprep.subr.bf16.mxu0 0
        %1999 = vmatpush1.bf16.msra.mxu0 0
        %2000 = vmatprep.subr.bf16.mxu0 0
        %2001 = vmatpush1.bf16.msra.mxu0 0
        %2002 = vmatprep.subr.bf16.mxu0 0
        %2003 = vmatpush1.bf16.msra.mxu0 0
        %2004 = vmatprep.subr.bf16.mxu0 0
        %2005 = vmatpush1.bf16.msra.mxu0 0
        %2006 = vmatprep.subr.bf16.mxu0 0
        %2007 = vmatpush1.bf16.msra.mxu0 0
        %2008 = vmatprep.subr.bf16.mxu0 0
        %2009 = vmatpush1.bf16.msra.mxu0 0
        %2010 = vmatprep.subr.bf16.mxu0 0
        %2011 = vmatpush1.bf16.msra.mxu0 0
        %2012 = vmatprep.subr.bf16.mxu0 0
        %2013 = vmatpush1.bf16.msra.mxu0 0
        %2014 = vmatprep.subr.bf16.mxu0 0
        %2015 = vmatpush1.bf16.msra.mxu0 0
        %2016 = vmatprep.subr.bf16.mxu0 0
        %2017 = vmatpush1.bf16.msra.mxu0 0
        %2018 = vmatprep.subr.bf16.mxu0 0
        %2019 = vmatpush1.bf16.msra.mxu0 0
        %2020 = vmatprep.mubr.bf16.mxu0 0
        %2021 = vmatmul.mubr.bf16.gmra.mrb[0].mxu0 %v1986
        %v2022 = vpop.f32.mrb[0].mxu0
        %v2023 = vadd.f32 %v1971, %v2022
        %v2024 = vpop.f32.mrb[0].mxu0
        %v2025 = vpop.f32.mrb[0].mxu0
        %v2026 = vadd.f32 %v1971, %v2025
        %v2027 = vpop.f32.mrb[0].mxu0
        %2028 = vdwg.mxu0
        %v2029 = vadd.f32 %v925, %v2023
        %v2030 = vadd.f32 %v926, %v2026
        %v2031 = vld [vmem:[%s776] sm:$0x1]
        %v2032 = vld [vmem:[%s784] sm:$0x1]
        %v2033 = vsel %vm929, %v2029, 0.0
        %2034 = vadd.xlane.f32.xlu0 %v2033
        %v2035 = vpop.xlane.xlu0 %2034
        %v2036 = vsel %vm929, %v2030, 0.0
        %2037 = vadd.xlane.f32.xlu0 %v2036
        %v2038 = vpop.xlane.xlu0 %2037
        %v2039 = vmul.f32 %v2035, %v936
        %v2040 = vmul.f32 %v2038, %v936
        %v2041 = vsub.f32 %v2029, %v2039
        %v2042 = vsub.f32 %v2030, %v2040
        %v2043 = vmul.f32 %v2041, %v2041
        %v2044 = vmul.f32 %v2042, %v2042
        %v2045 = vsel %vm929, %v2043, 0.0
        %2046 = vadd.xlane.f32.xlu0 %v2045
        %v2047 = vpop.xlane.xlu0 %2046
        %v2048 = vsel %vm929, %v2044, 0.0
        %2049 = vadd.xlane.f32.xlu0 %v2048
        %v2050 = vpop.xlane.xlu0 %2049
        %v2051 = vmul.f32 %v2047, %v936
        %v2052 = vmul.f32 %v2050, %v936
        %v2053 = vadd.f32 %v2051, 1e-05
        %v2054 = vadd.f32 %v2052, 1e-05
        %v2055 = vrsqrt.pop %v2053
        %v2056 = vrsqrt.pop %v2054
        %v2057 = vmul.f32 %v2041, %v2055
        %v2058 = vmul.f32 %v2042, %v2056
        %v2060 = vlaneseq
        %v2061 = vshrl.u32 %v2060, 7
        %v2062 = vsub.s32 0, %v2061
        %v2063 = vrot.slane %v2031, %v2062
        %v2065 = vmul.f32 %v2063, %v2057
        %v2066 = vmul.f32 %v2063, %v2058
        %v2068 = vlaneseq
        %v2069 = vshrl.u32 %v2068, 7
        %v2070 = vsub.s32 0, %v2069
        %v2071 = vrot.slane %v2032, %v2070
        %v2073 = vadd.f32 %v2065, %v2071
        %v2074 = vadd.f32 %v2066, %v2071
        %v2075 = vpack.c.bf16 %v2074, %v2073
        %v2076 = vld [vmem:[%s793] sm:$0xf]
        %v2077 = vld [vmem:[%s793 + $0x4] sm:$0xf]
        %v2078 = vld [vmem:[%s793 + $0x8] sm:$0xf]
        %v2079 = vld [vmem:[%s793 + $0xc] sm:$0xf]
        %v2080 = vld [vmem:[%s801] sm:$0x1]
        %v2082 = vlaneseq
        %v2083 = vshrl.u32 %v2082, 7
        %v2084 = vsub.s32 0, %v2083
        %v2085 = vrot.slane %v2080, %v2084
        %v2091 = vunpack.c.l.b16 %v2076
        %v2092 = vunpack.c.l.b16 %v2077
        %v2093 = vunpack.c.l.b16 %v2078
        %v2094 = vunpack.c.l.b16 %v2079
        %v2095 = vpack.c.b16 %v2092, %v2091
        %v2096 = vpack.c.b16 %v2094, %v2093
        %v2100 = vsel %vm929, %v2075, 0
        %2102 = vmatprep.subr.bf16.mxu0 0
        %2103 = vmatpush1.bf16.msra.mxu0 %v2095
        %2104 = vmatprep.subr.bf16.mxu0 0
        %2105 = vmatpush1.bf16.msra.mxu0 %v2096
        %2106 = vmatprep.subr.bf16.mxu0 0
        %2107 = vmatpush1.bf16.msra.mxu0 0
        %2108 = vmatprep.subr.bf16.mxu0 0
        %2109 = vmatpush1.bf16.msra.mxu0 0
        %2110 = vmatprep.subr.bf16.mxu0 0
        %2111 = vmatpush1.bf16.msra.mxu0 0
        %2112 = vmatprep.subr.bf16.mxu0 0
        %2113 = vmatpush1.bf16.msra.mxu0 0
        %2114 = vmatprep.subr.bf16.mxu0 0
        %2115 = vmatpush1.bf16.msra.mxu0 0
        %2116 = vmatprep.subr.bf16.mxu0 0
        %2117 = vmatpush1.bf16.msra.mxu0 0
        %2118 = vmatprep.subr.bf16.mxu0 0
        %2119 = vmatpush1.bf16.msra.mxu0 0
        %2120 = vmatprep.subr.bf16.mxu0 0
        %2121 = vmatpush1.bf16.msra.mxu0 0
        %2122 = vmatprep.subr.bf16.mxu0 0
        %2123 = vmatpush1.bf16.msra.mxu0 0
        %2124 = vmatprep.subr.bf16.mxu0 0
        %2125 = vmatpush1.bf16.msra.mxu0 0
        %2126 = vmatprep.subr.bf16.mxu0 0
        %2127 = vmatpush1.bf16.msra.mxu0 0
        %2128 = vmatprep.subr.bf16.mxu0 0
        %2129 = vmatpush1.bf16.msra.mxu0 0
        %2130 = vmatprep.subr.bf16.mxu0 0
        %2131 = vmatpush1.bf16.msra.mxu0 0
        %2132 = vmatprep.subr.bf16.mxu0 0
        %2133 = vmatpush1.bf16.msra.mxu0 0
        %2134 = vmatprep.mubr.bf16.mxu0 0
        %2135 = vmatmul.mubr.bf16.gmra.mrb[0].mxu0 %v2100
        %v2136 = vpop.f32.mrb[0].mxu0
        %v2137 = vadd.f32 %v2085, %v2136
        %v2138 = vpop.f32.mrb[0].mxu0
        %v2139 = vpop.f32.mrb[0].mxu0
        %v2140 = vadd.f32 %v2085, %v2139
        %v2141 = vpop.f32.mrb[0].mxu0
        %2142 = vdwg.mxu0
        %v2143 = vmax.f32 %v2137, 0.0
        %v2144 = vmax.f32 %v2140, 0.0
        %v2145 = vpack.c.bf16 %v2144, %v2143
        %v2146 = vld [vmem:[%s810] sm:$0xf]
        %v2147 = vld [vmem:[%s810 + $0x4] sm:$0xf]
        %v2148 = vld [vmem:[%s810 + $0x8] sm:$0xf]
        %v2149 = vld [vmem:[%s810 + $0xc] sm:$0xf]
        %v2150 = vld [vmem:[%s810 + $0x10] sm:$0xf]
        %v2151 = vld [vmem:[%s810 + $0x14] sm:$0xf]
        %v2152 = vld [vmem:[%s810 + $0x18] sm:$0xf]
        %v2153 = vld [vmem:[%s810 + $0x1c] sm:$0xf]
        %v2154 = vld [vmem:[%s818] sm:$0x1]
        %v2156 = vlaneseq
        %v2157 = vshrl.u32 %v2156, 7
        %v2158 = vsub.s32 0, %v2157
        %v2159 = vrot.slane %v2154, %v2158
        %v2169 = vunpack.c.l.b16 %v2146
        %v2170 = vunpack.c.l.b16 %v2147
        %v2171 = vunpack.c.l.b16 %v2148
        %v2172 = vunpack.c.l.b16 %v2149
        %v2173 = vunpack.c.l.b16 %v2150
        %v2174 = vunpack.c.l.b16 %v2151
        %v2175 = vunpack.c.l.b16 %v2152
        %v2176 = vunpack.c.l.b16 %v2153
        %v2177 = vpack.c.b16 %v2170, %v2169
        %v2178 = vpack.c.b16 %v2172, %v2171
        %v2179 = vpack.c.b16 %v2174, %v2173
        %v2180 = vpack.c.b16 %v2176, %v2175
        %vm2185 = vcmask 523264
        %v2187 = vsel %vm2185, %v2145, 0
        %2189 = vmatprep.subr.bf16.mxu0 0
        %2190 = vmatpush1.bf16.msra.mxu0 %v2177
        %2191 = vmatprep.subr.bf16.mxu0 0
        %2192 = vmatpush1.bf16.msra.mxu0 %v2178
        %2193 = vmatprep.subr.bf16.mxu0 0
        %2194 = vmatpush1.bf16.msra.mxu0 %v2179
        %2195 = vmatprep.subr.bf16.mxu0 0
        %2196 = vmatpush1.bf16.msra.mxu0 %v2180
        %2197 = vmatprep.subr.bf16.mxu0 0
        %2198 = vmatpush1.bf16.msra.mxu0 0
        %2199 = vmatprep.subr.bf16.mxu0 0
        %2200 = vmatpush1.bf16.msra.mxu0 0
        %2201 = vmatprep.subr.bf16.mxu0 0
        %2202 = vmatpush1.bf16.msra.mxu0 0
        %2203 = vmatprep.subr.bf16.mxu0 0
        %2204 = vmatpush1.bf16.msra.mxu0 0
        %2205 = vmatprep.subr.bf16.mxu0 0
        %2206 = vmatpush1.bf16.msra.mxu0 0
        %2207 = vmatprep.subr.bf16.mxu0 0
        %2208 = vmatpush1.bf16.msra.mxu0 0
        %2209 = vmatprep.subr.bf16.mxu0 0
        %2210 = vmatpush1.bf16.msra.mxu0 0
        %2211 = vmatprep.subr.bf16.mxu0 0
        %2212 = vmatpush1.bf16.msra.mxu0 0
        %2213 = vmatprep.subr.bf16.mxu0 0
        %2214 = vmatpush1.bf16.msra.mxu0 0
        %2215 = vmatprep.subr.bf16.mxu0 0
        %2216 = vmatpush1.bf16.msra.mxu0 0
        %2217 = vmatprep.subr.bf16.mxu0 0
        %2218 = vmatpush1.bf16.msra.mxu0 0
        %2219 = vmatprep.subr.bf16.mxu0 0
        %2220 = vmatpush1.bf16.msra.mxu0 0
        %2221 = vmatprep.mubr.bf16.mxu0 0
        %2222 = vmatmul.mubr.bf16.gmra.mrb[0].mxu0 %v2187
        %v2223 = vpop.f32.mrb[0].mxu0
        %v2224 = vadd.f32 %v2159, %v2223
        %v2225 = vpop.f32.mrb[0].mxu0
        %v2226 = vpop.f32.mrb[0].mxu0
        %v2227 = vadd.f32 %v2159, %v2226
        %v2228 = vpop.f32.mrb[0].mxu0
        %2229 = vdwg.mxu0
        %v2230 = vadd.f32 %v2029, %v2224
        %v2231 = vadd.f32 %v2030, %v2227
        %p2232 = scmp.lt.s32.totalorder %s47, 3
        // Predicated region
        $region145: #{tpu_custom_call.1} parent=79 // pred_check
          %p2233 = pneg %p2232
        $region146: #{tpu_custom_call.1} parent=79 // pred_check_branch
          %2235 = sbr.rel (%p2233) target = $region148
        $region147: #{tpu_custom_call.1} parent=79 // pred_region
          %2236 = vst.msk [vmem:[#allocation26] sm:$0xff] %vm929, %v2230
          %2237 = vst.msk [vmem:[#allocation26 + $0x8] sm:$0xff] %vm929, %v2231
        $region148: #{tpu_custom_call.1} parent=79 // pred_fallthru
          _
        %p2238 = scmp.eq.s32.totalorder %s47, 3
        // Predicated region
        $region149: #{tpu_custom_call.1} parent=79 // pred_check
          %p2239 = pneg %p2238
        $region150: #{tpu_custom_call.1} parent=79 // pred_check_branch
          %2241 = sbr.rel (%p2239) target = $region152
        $region151: #{tpu_custom_call.1} parent=79 // pred_region
          %v2242 = vld [vmem:[#allocation23] sm:$0x1]
          %v2243 = vld [vmem:[#allocation25] sm:$0x1]
          %v2244 = vsel %vm929, %v2230, 0.0
          %2245 = vadd.xlane.f32.xlu0 %v2244
          %v2246 = vpop.xlane.xlu0 %2245
          %v2247 = vsel %vm929, %v2231, 0.0
          %2248 = vadd.xlane.f32.xlu0 %v2247
          %v2249 = vpop.xlane.xlu0 %2248
          %v2250 = vmul.f32 %v2246, %v936
          %v2251 = vmul.f32 %v2249, %v936
          %v2252 = vsub.f32 %v2230, %v2250
          %v2253 = vsub.f32 %v2231, %v2251
          %v2254 = vmul.f32 %v2252, %v2252
          %v2255 = vmul.f32 %v2253, %v2253
          %v2256 = vsel %vm929, %v2254, 0.0
          %2257 = vadd.xlane.f32.xlu0 %v2256
          %v2258 = vpop.xlane.xlu0 %2257
          %v2259 = vsel %vm929, %v2255, 0.0
          %2260 = vadd.xlane.f32.xlu0 %v2259
          %v2261 = vpop.xlane.xlu0 %2260
          %v2262 = vmul.f32 %v2258, %v936
          %v2263 = vmul.f32 %v2261, %v936
          %v2264 = vadd.f32 %v2262, 1e-12
          %v2265 = vadd.f32 %v2263, 1e-12
          %v2266 = vrsqrt.pop %v2264
          %v2267 = vrsqrt.pop %v2265
          %v2268 = vmul.f32 %v2252, %v2266
          %v2269 = vmul.f32 %v2253, %v2267
          %v2271 = vlaneseq
          %v2272 = vshrl.u32 %v2271, 7
          %v2273 = vsub.s32 0, %v2272
          %v2274 = vrot.slane %v2242, %v2273
          %v2276 = vmul.f32 %v2274, %v2268
          %v2277 = vmul.f32 %v2274, %v2269
          %v2279 = vlaneseq
          %v2280 = vshrl.u32 %v2279, 7
          %v2281 = vsub.s32 0, %v2280
          %v2282 = vrot.slane %v2243, %v2281
          %v2284 = vadd.f32 %v2276, %v2282
          %v2285 = vadd.f32 %v2277, %v2282
          %2286 = vst.msk [vmem:[#allocation26] sm:$0xff] %vm929, %v2284
          %2287 = vst.msk [vmem:[#allocation26 + $0x8] sm:$0xff] %vm929, %v2285
        $region152: #{tpu_custom_call.1} parent=79 // pred_fallthru
          _
        // Predicated region
        $region153: #{tpu_custom_call.1} parent=79 // pred_check
          %p2288 = pneg %p435
        $region154: #{tpu_custom_call.1} parent=79 // pred_check_branch
          %2290 = sbr.rel (%p2288) target = $region156
        $region155: #{tpu_custom_call.1} parent=79 // pred_region
          %s2292 = ssub.s32 256, 256
          %2293 = vsyncadd [#allocation4], %s2292
          %s2294 = sshll.u32 [#allocation26], 4
          %s2295 = int_to_ptr.vmem [resolvable:$true] %s2294
          %2300 = dma.vmem_to_hbm [thread:$0]  %s2295, 256, %s15, [#allocation4], 128, 128, 8
        $region156: #{tpu_custom_call.1} parent=79 // pred_fallthru
          _
        // Predicated region
        $region157: #{tpu_custom_call.1} parent=79 // pred_check
          %p2301 = pneg %p435
        $region158: #{tpu_custom_call.1} parent=79 // pred_check_branch
          %2303 = sbr.rel (%p2301) target = $region160
        $region159: #{tpu_custom_call.1} parent=79 // pred_region
          %2304 = dma.done [#allocation4], 256
        $region160: #{tpu_custom_call.1} parent=79 // pred_fallthru
          _
      $region80: #{tpu_custom_call.1} parent=5 // pred_fallthru
        _
      %p2305 = scmp.le.s32.totalorder 2, %s42
      // Predicated region
      $region161: #{tpu_custom_call.1} parent=5 // pred_check
        %p2306 = pneg %p2305
      $region162: #{tpu_custom_call.1} parent=5 // pred_check_branch
        %2308 = sbr.rel (%p2306) target = $region164
      $region163: #{tpu_custom_call.1} parent=5 // pred_region
        %s2309 = ssub.s32 %s42, 2
      $region164: #{tpu_custom_call.1} parent=5 // pred_fallthru
        _
    $region6: #{tpu_custom_call.1} parent=1 // loop_footer
      %s46 = sadd.s32 1, %s42
    $region7: #{tpu_custom_call.1} parent=1 // loop_footer_branch
      %41 = sbr.rel target = $region3
    $region8: #{tpu_custom_call.1} parent=1 // loop_exit
      _
    %2310 = vsyncpa [#allocation3], 1
    %s2311 = scalar_lea.sflag [#allocation3], 1
    %2312 = vsyncpa %s2311, 1
    %2313 = vsyncpa [#allocation6], 1
    %s2314 = scalar_lea.sflag [#allocation6], 1
    %2315 = vsyncpa %s2314, 1
    %2316 = vsyncpa [#allocation9], 1
    %s2317 = scalar_lea.sflag [#allocation9], 1
    %2318 = vsyncpa %s2317, 1
    %2319 = vsyncpa [#allocation12], 1
    %s2320 = scalar_lea.sflag [#allocation12], 1
    %2321 = vsyncpa %s2320, 1
    %2322 = vsyncpa [#allocation15], 1
    %s2323 = scalar_lea.sflag [#allocation15], 1
    %2324 = vsyncpa %s2323, 1
    %2325 = vsyncpa [#allocation18], 1
    %s2326 = scalar_lea.sflag [#allocation18], 1
    %2327 = vsyncpa %s2326, 1
    %2328 = vsyncpa [#allocation21], 1
    %s2329 = scalar_lea.sflag [#allocation21], 1
    %2330 = vsyncpa %s2329, 1
    %2331 = vsyncpa [#allocation24], 1
    %2332 = vsyncpa [#allocation4], 1
    %s2333 = scalar_lea.sflag [#allocation4], 1
    %2334 = vsyncpa %s2333, 1

</llo_original>
